<compile_context>
chip_gen: v7x
topology: tpu7x:2x2x1
jax: 0.10.0
libtpu: 0.0.40
codegen_flags: <defaults>
</compile_context>

<pallas_src>
import functools

import numpy as np
import jax
import jax.numpy as jnp
from jax.experimental import pallas as pl
from jax.experimental.pallas import tpu as pltpu

LN_EPS = 1e-5  # torch.nn.LayerNorm default


def _round_up(x, m):
    return ((x + m - 1) // m) * m


def _pick_tile(total, pref, align, min_tiles=1):
    """Largest multiple of `align` <= pref that divides `total`, preferring
    choices that give at least `min_tiles` grid steps."""
    best = align
    t = align
    while t <= min(pref, total):
        if total % t == 0 and total // t >= min_tiles:
            best = t
        t += align
    return best


def _vmem_cap_bytes():
    try:
        return int(pltpu.get_tpu_info().vmem_capacity_bytes)
    except Exception:
        return 64 * 1024 * 1024  # conservative (v7x physical VMEM)


# ----------------------------------------------------------------------------
# Kernel 1 (tiny): per-relation projection XW[r] = X @ W_r, bf16 in / bf16 out.
# ----------------------------------------------------------------------------
def xw_kernel(x_ref, w_ref, xw_ref):
    # x_ref  : (TMX, d_in)      bf16 node-feature row tile
    # w_ref  : (1, d_in, D_pad) bf16 relation-r weights (lane-dense D_pad)
    # xw_ref : (TMX, D_pad)     bf16 (f32 MXU accumulation, narrowed once)
    xw_ref[...] = jnp.dot(
        x_ref[...], w_ref[0],
        preferred_element_type=jnp.float32).astype(xw_ref.dtype)


# ----------------------------------------------------------------------------
# Kernel 2 (heavy): block-sparse  out = A @ XW  + bias + LayerNorm (+ ReLU).
# grid = (row tiles -> "parallel", max nonzero K tiles per row -> "arbitrary").
# Output block index is constant along K -> out_ref is the resident f32
# accumulator (no scratch).
# ----------------------------------------------------------------------------
def rgcn_agg_kernel(pk_ref, kt_ref, cnt_ref, a_ref, xw_ref, prm_ref, out_ref,
                    *, tk, d_valid, apply_relu, xw_resident):
    i = pl.program_id(0)
    k = pl.program_id(1)

    @pl.when(k == 0)
    def _():
        out_ref[...] = jnp.zeros_like(out_ref)

    # Only this row tile's real (nonzero) K tiles; the ragged tail is masked.
    @pl.when(k < cnt_ref[i])
    def _():
        if xw_resident:
            start = pl.multiple_of(kt_ref[i, k] * tk, 128)
            xw = xw_ref[pl.ds(start, tk), :]
        else:
            xw = xw_ref[...]
        # Native bf16 x bf16 MXU dot, f32 accumulation (no f32 widen of A).
        out_ref[...] += jnp.dot(a_ref[0], xw, preferred_element_type=jnp.float32)

    @pl.when(k == pl.num_programs(1) - 1)
    def _():
        z = out_ref[...] + prm_ref[0:1, :]                 # + bias
        lane = jax.lax.broadcasted_iota(jnp.int32, z.shape, 1)
        mask = lane < d_valid                              # real (unpadded) channels
        inv_d = 1.0 / float(d_valid)
        zm = jnp.where(mask, z, 0.0)
        mu = jnp.sum(zm, axis=-1, keepdims=True) * inv_d
        diff = jnp.where(mask, z - mu, 0.0)
        var = jnp.sum(diff * diff, axis=-1, keepdims=True) * inv_d
        y = diff * jax.lax.rsqrt(var + LN_EPS)
        y = y * prm_ref[1:2, :] + prm_ref[2:3, :]          # * gamma + beta
        if apply_relu:
            y = jnp.maximum(y, 0.0)
        out_ref[...] = jnp.where(mask, y, 0.0)


# ----------------------------------------------------------------------------
# pallas_call wrappers
# ----------------------------------------------------------------------------
def _project(x_bf16, w_pad, *, tmx, vmem_limit):
    n_pad, d_in = x_bf16.shape
    R, _, d_pad = w_pad.shape
    nblk = n_pad // tmx
    return pl.pallas_call(
        xw_kernel,
        out_shape=jax.ShapeDtypeStruct((R * n_pad, d_pad), jnp.bfloat16),
        grid_spec=pltpu.PrefetchScalarGridSpec(
            num_scalar_prefetch=0,
            grid=(nblk, R),
            in_specs=[
                pl.BlockSpec((tmx, d_in), lambda i, r: (i, 0)),
                pl.BlockSpec((1, d_in, d_pad), lambda i, r: (r, 0, 0)),
            ],
            # Write directly into the (R*n_pad, D_pad) layout stage 2 consumes.
            out_specs=pl.BlockSpec((tmx, d_pad), lambda i, r: (r * nblk + i, 0)),
        ),
        compiler_params=pltpu.CompilerParams(
            dimension_semantics=("parallel", "arbitrary"),
            vmem_limit_bytes=vmem_limit),
    )(x_bf16, w_pad)


def _aggregate(pk_idx, kt_idx, cnt, a_packed, xw, prm, *, n_pad, tm, tk,
               d_valid, apply_relu, xw_resident, vmem_limit):
    nrt = n_pad // tm
    max_nt = kt_idx.shape[1]
    d_pad = xw.shape[1]
    if xw_resident:
        xw_spec = pl.BlockSpec((xw.shape[0], d_pad),
                               lambda i, k, pk, kt, c: (0, 0))
    else:
        xw_spec = pl.BlockSpec((tk, d_pad),
                               lambda i, k, pk, kt, c: (kt[i, k], 0))
    kernel = functools.partial(rgcn_agg_kernel, tk=tk, d_valid=d_valid,
                               apply_relu=apply_relu, xw_resident=xw_resident)
    return pl.pallas_call(
        kernel,
        out_shape=jax.ShapeDtypeStruct((n_pad, d_pad), jnp.float32),
        grid_spec=pltpu.PrefetchScalarGridSpec(
            num_scalar_prefetch=3,            # pk_idx, kt_idx, cnt -> SMEM
            grid=(nrt, max_nt),               # reduction axis last
            in_specs=[
                pl.BlockSpec((1, tm, tk), lambda i, k, pk, kt, c: (pk[i, k], 0, 0)),
                xw_spec,
                pl.BlockSpec((3, d_pad), lambda i, k, pk, kt, c: (0, 0)),
            ],
            out_specs=pl.BlockSpec((tm, d_pad), lambda i, k, pk, kt, c: (i, 0)),
        ),
        compiler_params=pltpu.CompilerParams(
            dimension_semantics=("parallel", "arbitrary"),
            vmem_limit_bytes=vmem_limit),
    )(pk_idx, kt_idx, cnt, a_packed, xw, prm)


# ----------------------------------------------------------------------------
# Graph construction (host, numpy): enrich + row-normalized adjacency in the
# horizontal layout with per-relation column stride n_pad, packed into the
# nonzero (tm, tk) tiles + block-sparse metadata.
# ----------------------------------------------------------------------------
def enrich_np(triples, n, r):
    triples = np.asarray(triples, np.int64)
    inverses = np.stack([triples[:, 2], triples[:, 1] + r, triples[:, 0]], axis=1)
    idx = np.arange(n, dtype=np.int64)
    selfloops = np.stack([idx, np.full(n, 2 * r, np.int64), idx], axis=1)
    return np.concatenate([triples, inverses, selfloops], axis=0)


def build_graph(triples, n, r, *, tm, tk, n_pad):
    R = 2 * r + 1
    allt = enrich_np(triples, n, r)
    ver_rows = allt[:, 1] * n + allt[:, 0]                    # rel*n + from
    deg = np.bincount(ver_rows, minlength=R * n).astype(np.float32)
    vals = 1.0 / deg[ver_rows]                                # 1/degree rows

    k_pad = R * n_pad
    a = np.zeros((n_pad, k_pad), np.float32)
    cols = allt[:, 1] * n_pad + allt[:, 2]                    # rel*n_pad + to
    np.add.at(a, (allt[:, 0], cols), vals)                    # coalesce duplicates

    nrt, nkt = n_pad // tm, k_pad // tk
    blocks = a.reshape(nrt, tm, nkt, tk)
    nz = np.abs(blocks).sum(axis=(1, 3)) > 0.0                # nonzero-tile mask
    cnt = nz.sum(axis=1).astype(np.int32)
    max_nt = max(int(cnt.max()), 1)

    kt_idx = np.zeros((nrt, max_nt), np.int32)                # which XW K tile
    pk_idx = np.zeros((nrt, max_nt), np.int32)                # which packed A tile
    packed, ptr = [], 0
    for i in range(nrt):
        cols_i = np.nonzero(nz[i])[0]
        for j, c in enumerate(cols_i):
            packed.append(blocks[i, :, c, :])
            kt_idx[i, j] = c
            pk_idx[i, j] = ptr + j
        if len(cols_i):                                       # ragged tail -> repeat last
            kt_idx[i, len(cols_i):] = cols_i[-1]
            pk_idx[i, len(cols_i):] = ptr + len(cols_i) - 1
        ptr += len(cols_i)
    if not packed:
        packed.append(np.zeros((tm, tk), np.float32))
    a_packed = np.stack(packed, axis=0)                       # (total_nz, tm, tk)
    return a_packed, pk_idx, kt_idx, cnt, a


# ----------------------------------------------------------------------------
# Model build: all padding / packing done once here (outside the jit).
# ----------------------------------------------------------------------------
def make_rgcn_forward(triples, n, r, weights1, bias1, ln1_g, ln1_b,
                      weights2, bias2, ln2_g, ln2_b,
                      *, tm_pref=512, tk_pref=2048, tmx_pref=512,
                      force_xw_resident=None):
    R = 2 * r + 1
    emb, hidden = weights1.shape[1], weights1.shape[2]
    numcls = weights2.shape[2]
    h1_pad = _round_up(hidden, 128)
    h2_pad = _round_up(numcls, 128)

    # ---- tiling ----------------------------------------------------------------
    n_pad = _round_up(n, 128)
    tk = _pick_tile(n_pad, tk_pref, align=128, min_tiles=1)   # divides n_pad
    tm = _pick_tile(n_pad, tm_pref, align=16, min_tiles=2)    # >=2 parallel row tiles
    tmx = _pick_tile(n_pad, tmx_pref, align=128, min_tiles=1)
    k_pad = R * n_pad

    # ---- graph (built once, bf16 once) -----------------------------------------
    a_packed_np, pk_np, kt_np, cnt_np, a_dense_np = build_graph(
        triples, n, r, tm=tm, tk=tk, n_pad=n_pad)
    a_packed = jnp.asarray(a_packed_np, jnp.bfloat16)
    pk_idx = jnp.asarray(pk_np)
    kt_idx = jnp.asarray(kt_np)
    cnt = jnp.asarray(cnt_np)

    # ---- parameters padded / packed once ----------------------------------------
    def pad_w(w, d_in_pad, d_out_pad):
        wp = np.zeros((R, d_in_pad, d_out_pad), np.float32)
        wp[:, :w.shape[1], :w.shape[2]] = np.asarray(w, np.float32)
        return jnp.asarray(wp, jnp.bfloat16)

    def pack_prm(bias, gamma, beta, d_pad):
        p = np.zeros((3, d_pad), np.float32)
        p[0, :bias.shape[0]] = np.asarray(bias, np.float32)
        p[1, :gamma.shape[0]] = np.asarray(gamma, np.float32)
        p[2, :beta.shape[0]] = np.asarray(beta, np.float32)
        return jnp.asarray(p)

    w1_p = pad_w(weights1, emb, h1_pad)
    w2_p = pad_w(weights2, h1_pad, h2_pad)
    prm1 = pack_prm(bias1, ln1_g, ln1_b, h1_pad)
    prm2 = pack_prm(bias2, ln2_g, ln2_b, h2_pad)

    # ---- VMEM budget / XW residency gate ----------------------------------------
    cap = _vmem_cap_bytes()
    xw_bytes = k_pad * max(h1_pad, h2_pad) * 2
    if force_xw_resident is None:
        xw_resident = 2 * xw_bytes <= min(24 << 20, int(cap * 0.3))
    else:
        xw_resident = bool(force_xw_resident)
    need = 2 * tm * tk * 2 + 2 * tm * max(h1_pad, h2_pad) * 4 + 2 * 3 * 128 * 4
    need += (2 * xw_bytes) if xw_resident else (2 * tk * max(h1_pad, h2_pad) * 2)
    budget_cap = max(int(cap * 0.6), need + (2 << 20))
    vmem_limit = int(min(max(need + (4 << 20), 32 << 20), budget_cap))

    agg = functools.partial(_aggregate, n_pad=n_pad, tm=tm, tk=tk,
                            xw_resident=xw_resident, vmem_limit=vmem_limit)

    def forward(features, a_packed, pk_idx, kt_idx, cnt, w1_p, prm1, w2_p, prm2):
        # feature_dropout / dropout are identity (eval mode).
        x = features.astype(jnp.float32)
        x = jnp.pad(x, ((0, n_pad - x.shape[0]), (0, 0))).astype(jnp.bfloat16)
        xw1 = _project(x, w1_p, tmx=tmx, vmem_limit=vmem_limit)      # (k_pad, h1_pad) bf16
        h = agg(pk_idx, kt_idx, cnt, a_packed, xw1, prm1,
                d_valid=hidden, apply_relu=True)                     # (n_pad, h1_pad) f32
        xw2 = _project(h.astype(jnp.bfloat16), w2_p, tmx=tmx,
                       vmem_limit=vmem_limit)                        # (k_pad, h2_pad) bf16
        out = agg(pk_idx, kt_idx, cnt, a_packed, xw2, prm2,
                  d_valid=numcls, apply_relu=False)                  # (n_pad, h2_pad) f32
        return out[:n, :numcls]

    jitted = jax.jit(forward)

    def call(features):
        return jitted(features, a_packed, pk_idx, kt_idx, cnt,
                      w1_p, prm1, w2_p, prm2)

    call.a_dense = a_dense_np          # exact (f32) dense adjacency, for reference
    call.n_pad = n_pad
    return call


# ----------------------------------------------------------------------------
# Self-test
# ----------------------------------------------------------------------------
if __name__ == "__main__":
    n = 16          # entities
    r_orig = 3      # relations (before enrich)
    emb = 32
    hidden = 32
    numcls = 8
    num_triples = 40
    R = 2 * r_orig + 1

    rng = np.random.default_rng(0)
    triples = np.stack([
        rng.integers(0, n, size=num_triples),
        rng.integers(0, r_orig, size=num_triples),
        rng.integers(0, n, size=num_triples),
    ], axis=1)

    key = jax.random.PRNGKey(0)
    k_feat, k_w1, k_w2 = jax.random.split(key, 3)
    features = jax.random.normal(k_feat, (n, emb), dtype=jnp.float32)

    def xavier(k, shape, fan_in, fan_out):
        gain = np.sqrt(2.0)                          # calculate_gain('relu')
        bound = gain * np.sqrt(6.0 / (fan_in + fan_out))
        return jax.random.uniform(k, shape, jnp.float32, -bound, bound)

    w1 = xavier(k_w1, (R, emb, hidden), emb, hidden)
    w2 = xavier(k_w2, (R, hidden, numcls), hidden, numcls)
    bias1 = jnp.zeros((hidden,), jnp.float32)
    bias2 = jnp.zeros((numcls,), jnp.float32)
    ln1_g = jnp.ones((hidden,), jnp.float32)
    ln1_b = jnp.zeros((hidden,), jnp.float32)
    ln2_g = jnp.ones((numcls,), jnp.float32)
    ln2_b = jnp.zeros((numcls,), jnp.float32)

    # Exercise both stage-2 XW paths (VMEM-resident and streamed).
    fwd_auto = make_rgcn_forward(triples, n, r_orig, w1, bias1, ln1_g, ln1_b,
                                 w2, bias2, ln2_g, ln2_b)
    fwd_stream = make_rgcn_forward(triples, n, r_orig, w1, bias1, ln1_g, ln1_b,
                                   w2, bias2, ln2_g, ln2_b,
                                   force_xw_resident=False)
    out_a = jax.block_until_ready(fwd_auto(features))
    out_s = jax.block_until_ready(fwd_stream(features))

    # ---- references ----------------------------------------------------------
    HIGH = jax.lax.Precision.HIGHEST
    n_pad = fwd_auto.n_pad
    a_dense = jnp.asarray(fwd_auto.a_dense)                             # exact f32
    a_rel_exact = a_dense.reshape(n_pad, R, n_pad).transpose(1, 0, 2)[:, :n, :n]
    a_rel_q = a_dense.astype(jnp.bfloat16).astype(jnp.float32) \
                     .reshape(n_pad, R, n_pad).transpose(1, 0, 2)[:, :n, :n]

    def q(v):
        return v.astype(jnp.bfloat16).astype(jnp.float32)

    def ref_layer(a_rel, x, w, b, g, be, relu, matched):
        if matched:   # emulate the kernel's bf16 quantization of X/W/XW and A
            xw = jnp.einsum('nd,rdh->rnh', q(x), q(w), precision=HIGH)
            h = jnp.einsum('rij,rjh->ih', a_rel, q(xw), precision=HIGH)
        else:         # exact f32 (torch semantics)
            hx = jnp.einsum('rij,jd->rid', a_rel, x, precision=HIGH)
            h = jnp.einsum('rid,rdh->ih', hx, w, precision=HIGH)
        z = h + b[None, :]
        mu = jnp.mean(z, axis=-1, keepdims=True)
        var = jnp.mean(jnp.square(z - mu), axis=-1, keepdims=True)
        y = (z - mu) * jax.lax.rsqrt(var + LN_EPS) * g[None, :] + be[None, :]
        return jnp.maximum(y, 0.0) if relu else y

    h_m = ref_layer(a_rel_q, features, w1, bias1, ln1_g, ln1_b, True, True)
    ref_m = ref_layer(a_rel_q, h_m, w2, bias2, ln2_g, ln2_b, False, True)
    h_e = ref_layer(a_rel_exact, features, w1, bias1, ln1_g, ln1_b, True, False)
    ref_e = ref_layer(a_rel_exact, h_e, w2, bias2, ln2_g, ln2_b, False, False)

    out_a_np = np.asarray(out_a)
    out_s_np = np.asarray(out_s)
    # Quantization-matched reference (bf16 A / X / W / XW, f32 accumulation).
    np.testing.assert_allclose(out_a_np, np.asarray(ref_m), rtol=2e-2, atol=2e-2)
    np.testing.assert_allclose(out_s_np, np.asarray(ref_m), rtol=2e-2, atol=2e-2)
    # Both kernel variants compute the same thing.
    np.testing.assert_allclose(out_a_np, out_s_np, rtol=1e-5, atol=1e-5)
    # True f32 reference (torch semantics): bf16 quantization of the adjacency
    # and of X/W/XW is intentional (the kernel is HBM-bound on these streams);
    # documented tolerance vs the exact reference:
    np.testing.assert_allclose(out_a_np, np.asarray(ref_e), rtol=0.25, atol=0.25)

    assert out_a.shape == (n, numcls)
    print("KERNEL_OK")
</pallas_src>

<mosaic_0001>
module attributes {stable_mosaic.version = 11 : i64} {
  func.func @xw_kernel(%arg0: i32, %arg1: i32, %arg2: memref<128x32xbf16, #tpu.memory_space<vmem>>, %arg3: memref<1x32x128xbf16, #tpu.memory_space<vmem>>, %arg4: memref<128x128xbf16, #tpu.memory_space<vmem>>) attributes {dimension_semantics = [#tpu.dimension_semantics<parallel>, #tpu.dimension_semantics<arbitrary>], iteration_bounds = array<i64: 1, 7>, scalar_prefetch = 0 : i64, scratch_operands = 0 : i64, tpu.core_type = #tpu.core_type<tc>, window_params = [{transform_indices = @transform_0, window_bounds = array<i64: 128, 32>}, {transform_indices = @transform_1, window_bounds = array<i64: 1, 32, 128>}, {transform_indices = @transform_2, window_bounds = array<i64: 128, 128>}]} {
    %c0 = arith.constant 0 : index
    %c0_0 = arith.constant 0 : index
    %0 = vector.load %arg2[%c0, %c0_0] : memref<128x32xbf16, #tpu.memory_space<vmem>>, vector<128x32xbf16>
    %c0_1 = arith.constant 0 : index
    %c0_2 = arith.constant 0 : index
    %c0_3 = arith.constant 0 : index
    %1 = vector.load %arg3[%c0_1, %c0_2, %c0_3] : memref<1x32x128xbf16, #tpu.memory_space<vmem>>, vector<1x32x128xbf16>
    %2 = vector.shape_cast %1 : vector<1x32x128xbf16> to vector<32x128xbf16>
    %cst = arith.constant dense<0.000000e+00> : vector<128x128xf32>
    %3 = tpu.matmul %0, %2, %cst {dimension_numbers = #tpu.dot_dimension_numbers<[1], [0], [0], [1], [0, 0, 1, 1], [], []>} : vector<128x32xbf16>, vector<32x128xbf16>, vector<128x128xf32> -> vector<128x128xf32>
    %4 = arith.truncf %3 : vector<128x128xf32> to vector<128x128xbf16>
    %c0_4 = arith.constant 0 : index
    %c0_5 = arith.constant 0 : index
    %5 = vector.load %arg4[%c0_4, %c0_5] : memref<128x128xbf16, #tpu.memory_space<vmem>>, vector<128x128xbf16>
    tpu.vector_store %arg4[%c0_4, %c0_5], %4 {strides = array<i32>} : memref<128x128xbf16, #tpu.memory_space<vmem>>, vector<128x128xbf16>,
    return
  }
  func.func @transform_0(%arg0: i32, %arg1: i32) -> (i32, i32) {
    %c0_i32 = arith.constant 0 : i32
    %c0_i32_0 = arith.constant 0 : i32
    return %arg0, %c0_i32 : i32, i32
  }
  func.func @transform_1(%arg0: i32, %arg1: i32) -> (i32, i32, i32) {
    %c0_i32 = arith.constant 0 : i32
    %c0_i32_0 = arith.constant 0 : i32
    %c0_i32_1 = arith.constant 0 : i32
    return %arg1, %c0_i32, %c0_i32_0 : i32, i32, i32
  }
  func.func @transform_2(%arg0: i32, %arg1: i32) -> (i32, i32) {
    %c1_i32 = arith.constant 1 : i32
    %0 = arith.muli %arg1, %c1_i32 : i32
    %1 = arith.addi %0, %arg0 : i32
    %c0_i32 = arith.constant 0 : i32
    %c0_i32_0 = arith.constant 0 : i32
    return %1, %c0_i32 : i32, i32
  }
}

module attributes {stable_mosaic.version = 11 : i64} {
  func.func @rgcn_agg_kernel(%arg0: i32, %arg1: i32, %arg2: memref<2x7xi32, #tpu.memory_space<smem>>, %arg3: memref<2x7xi32, #tpu.memory_space<smem>>, %arg4: memref<2xi32, #tpu.memory_space<smem>>, %arg5: memref<1x64x128xbf16, #tpu.memory_space<vmem>>, %arg6: memref<896x128xbf16, #tpu.memory_space<vmem>>, %arg7: memref<3x128xf32, #tpu.memory_space<vmem>>, %arg8: memref<64x128xf32, #tpu.memory_space<vmem>>) attributes {dimension_semantics = [#tpu.dimension_semantics<parallel>, #tpu.dimension_semantics<arbitrary>], iteration_bounds = array<i64: 2, 7>, scalar_prefetch = 3 : i64, scratch_operands = 0 : i64, tpu.core_type = #tpu.core_type<tc>, window_params = [{transform_indices = @transform_0, window_bounds = array<i64: 1, 64, 128>}, {pipeline_mode = #tpu.pipeline_mode<synchronous>, transform_indices = @transform_1, window_bounds = array<i64: 896, 128>}, {pipeline_mode = #tpu.pipeline_mode<synchronous>, transform_indices = @transform_2, window_bounds = array<i64: 3, 128>}, {transform_indices = @transform_3, window_bounds = array<i64: 64, 128>}]} {
    %c0_i32 = arith.constant 0 : i32
    %0 = arith.cmpi eq, %arg1, %c0_i32 : i32
    %1 = arith.extui %0 : i1 to i32
    %c0_i32_0 = arith.constant 0 : i32
    %2 = arith.cmpi ne, %1, %c0_i32_0 : i32
    scf.if %2 {
      %cst = arith.constant 0.000000e+00 : f32
      %11 = vector.broadcast %cst : f32 to vector<64x128xf32>
      %c0 = arith.constant 0 : index
      %c0_3 = arith.constant 0 : index
      %12 = vector.load %arg8[%c0, %c0_3] : memref<64x128xf32, #tpu.memory_space<vmem>>, vector<64x128xf32>
      tpu.vector_store %arg8[%c0, %c0_3], %11 {strides = array<i32>} : memref<64x128xf32, #tpu.memory_space<vmem>>, vector<64x128xf32>,
    } else {
    }
    %3 = arith.index_cast %arg0 : i32 to index
    %4 = memref.load %arg4[%3] : memref<2xi32, #tpu.memory_space<smem>>
    %5 = arith.cmpi slt, %arg1, %4 : i32
    %6 = arith.extui %5 : i1 to i32
    %c0_i32_1 = arith.constant 0 : i32
    %7 = arith.cmpi ne, %6, %c0_i32_1 : i32
    scf.if %7 {
      %11 = arith.index_cast %arg0 : i32 to index
      %12 = arith.index_cast %arg1 : i32 to index
      %13 = memref.load %arg3[%11, %12] : memref<2x7xi32, #tpu.memory_space<smem>>
      %c128_i32 = arith.constant 128 : i32
      %14 = arith.muli %13, %c128_i32 : i32
      %15 = tpu.assume_multiple %14, 128 : i32
      %16 = arith.index_cast %15 : i32 to index
      %c0 = arith.constant 0 : index
      %17 = vector.load %arg6[%16, %c0] : memref<896x128xbf16, #tpu.memory_space<vmem>>, vector<128x128xbf16>
      %c0_3 = arith.constant 0 : index
      %c0_4 = arith.constant 0 : index
      %18 = vector.load %arg8[%c0_3, %c0_4] : memref<64x128xf32, #tpu.memory_space<vmem>>, vector<64x128xf32>
      %c0_5 = arith.constant 0 : index
      %c0_6 = arith.constant 0 : index
      %c0_7 = arith.constant 0 : index
      %19 = vector.load %arg5[%c0_5, %c0_6, %c0_7] : memref<1x64x128xbf16, #tpu.memory_space<vmem>>, vector<1x64x128xbf16>
      %20 = vector.shape_cast %19 : vector<1x64x128xbf16> to vector<64x128xbf16>
      %cst = arith.constant dense<0.000000e+00> : vector<64x128xf32>
      %21 = tpu.matmul %20, %17, %cst {dimension_numbers = #tpu.dot_dimension_numbers<[1], [0], [0], [1], [0, 0, 1, 1], [], []>} : vector<64x128xbf16>, vector<128x128xbf16>, vector<64x128xf32> -> vector<64x128xf32>
      %22 = arith.addf %18, %21 : vector<64x128xf32>
      %c0_8 = arith.constant 0 : index
      %c0_9 = arith.constant 0 : index
      %23 = vector.load %arg8[%c0_8, %c0_9] : memref<64x128xf32, #tpu.memory_space<vmem>>, vector<64x128xf32>
      tpu.vector_store %arg8[%c0_8, %c0_9], %22 {strides = array<i32>} : memref<64x128xf32, #tpu.memory_space<vmem>>, vector<64x128xf32>,
    } else {
    }
    %c6_i32 = arith.constant 6 : i32
    %8 = arith.cmpi eq, %arg1, %c6_i32 : i32
    %9 = arith.extui %8 : i1 to i32
    %c0_i32_2 = arith.constant 0 : i32
    %10 = arith.cmpi ne, %9, %c0_i32_2 : i32
    scf.if %10 {
      %c0 = arith.constant 0 : index
      %c0_3 = arith.constant 0 : index
      %11 = vector.load %arg8[%c0, %c0_3] : memref<64x128xf32, #tpu.memory_space<vmem>>, vector<64x128xf32>
      %c0_4 = arith.constant 0 : index
      %c0_5 = arith.constant 0 : index
      %12 = vector.load %arg7[%c0_4, %c0_5] : memref<3x128xf32, #tpu.memory_space<vmem>>, vector<1x128xf32>
      %13 = vector.broadcast %12 : vector<1x128xf32> to vector<64x128xf32>
      %14 = arith.addf %11, %13 : vector<64x128xf32>
      %15 = tpu.iota {dimensions = array<i32: 1>} : vector<64x128xi32>
      %c32_i32 = arith.constant 32 : i32
      %16 = vector.broadcast %c32_i32 : i32 to vector<64x128xi32>
      %17 = arith.cmpi slt, %15, %16 : vector<64x128xi32>
      %cst = arith.constant 0.000000e+00 : f32
      %18 = vector.broadcast %cst : f32 to vector<64x128xf32>
      %19 = arith.select %17, %14, %18 : vector<64x128xi1>, vector<64x128xf32>
      %cst_6 = arith.constant dense<0.000000e+00> : vector<64xf32>
      %20 = vector.multi_reduction <add>, %19, %cst_6 [1] : vector<64x128xf32> to vector<64xf32>
      %21 = vector.shape_cast %20 : vector<64xf32> to vector<64x1xf32>
      %cst_7 = arith.constant 3.125000e-02 : f32
      %22 = vector.broadcast %cst_7 : f32 to vector<64x1xf32>
      %23 = arith.mulf %21, %22 : vector<64x1xf32>
      %24 = vector.broadcast %23 : vector<64x1xf32> to vector<64x128xf32>
      %25 = arith.subf %14, %24 : vector<64x128xf32>
      %cst_8 = arith.constant 0.000000e+00 : f32
      %26 = vector.broadcast %cst_8 : f32 to vector<64x128xf32>
      %27 = arith.select %17, %25, %26 : vector<64x128xi1>, vector<64x128xf32>
      %28 = arith.mulf %27, %27 : vector<64x128xf32>
      %cst_9 = arith.constant dense<0.000000e+00> : vector<64xf32>
      %29 = vector.multi_reduction <add>, %28, %cst_9 [1] : vector<64x128xf32> to vector<64xf32>
      %30 = vector.shape_cast %29 : vector<64xf32> to vector<64x1xf32>
      %cst_10 = arith.constant 3.125000e-02 : f32
      %31 = vector.broadcast %cst_10 : f32 to vector<64x1xf32>
      %32 = arith.mulf %30, %31 : vector<64x1xf32>
      %cst_11 = arith.constant 9.99999974E-6 : f32
      %33 = vector.broadcast %cst_11 : f32 to vector<64x1xf32>
      %34 = arith.addf %32, %33 : vector<64x1xf32>
      %35 = math.rsqrt %34 : vector<64x1xf32>
      %36 = vector.broadcast %35 : vector<64x1xf32> to vector<64x128xf32>
      %37 = arith.mulf %27, %36 : vector<64x128xf32>
      %c1 = arith.constant 1 : index
      %c0_12 = arith.constant 0 : index
      %38 = vector.load %arg7[%c1, %c0_12] : memref<3x128xf32, #tpu.memory_space<vmem>>, vector<1x128xf32>
      %39 = vector.broadcast %38 : vector<1x128xf32> to vector<64x128xf32>
      %40 = arith.mulf %37, %39 : vector<64x128xf32>
      %c2 = arith.constant 2 : index
      %c0_13 = arith.constant 0 : index
      %41 = vector.load %arg7[%c2, %c0_13] : memref<3x128xf32, #tpu.memory_space<vmem>>, vector<1x128xf32>
      %42 = vector.broadcast %41 : vector<1x128xf32> to vector<64x128xf32>
      %43 = arith.addf %40, %42 : vector<64x128xf32>
      %cst_14 = arith.constant 0.000000e+00 : f32
      %44 = vector.broadcast %cst_14 : f32 to vector<64x128xf32>
      %45 = arith.maximumf %43, %44 : vector<64x128xf32>
      %cst_15 = arith.constant 0.000000e+00 : f32
      %46 = vector.broadcast %cst_15 : f32 to vector<64x128xf32>
      %47 = arith.select %17, %45, %46 : vector<64x128xi1>, vector<64x128xf32>
      %c0_16 = arith.constant 0 : index
      %c0_17 = arith.constant 0 : index
      %48 = vector.load %arg8[%c0_16, %c0_17] : memref<64x128xf32, #tpu.memory_space<vmem>>, vector<64x128xf32>
      tpu.vector_store %arg8[%c0_16, %c0_17], %47 {strides = array<i32>} : memref<64x128xf32, #tpu.memory_space<vmem>>, vector<64x128xf32>,
    } else {
    }
    return
  }
  func.func @transform_0(%arg0: i32, %arg1: i32, %arg2: memref<2x7xi32, #tpu.memory_space<smem>>, %arg3: memref<2x7xi32, #tpu.memory_space<smem>>, %arg4: memref<2xi32, #tpu.memory_space<smem>>) -> (i32, i32, i32) {
    %0 = arith.index_cast %arg0 : i32 to index
    %1 = arith.index_cast %arg1 : i32 to index
    %2 = memref.load %arg2[%0, %1] : memref<2x7xi32, #tpu.memory_space<smem>>
    %c0_i32 = arith.constant 0 : i32
    %c0_i32_0 = arith.constant 0 : i32
    %c0_i32_1 = arith.constant 0 : i32
    return %2, %c0_i32, %c0_i32_0 : i32, i32, i32
  }
  func.func @transform_1(%arg0: i32, %arg1: i32, %arg2: memref<2x7xi32, #tpu.memory_space<smem>>, %arg3: memref<2x7xi32, #tpu.memory_space<smem>>, %arg4: memref<2xi32, #tpu.memory_space<smem>>) -> (i32, i32) {
    %c0_i32 = arith.constant 0 : i32
    %c0_i32_0 = arith.constant 0 : i32
    %c0_i32_1 = arith.constant 0 : i32
    return %c0_i32, %c0_i32_0 : i32, i32
  }
  func.func @transform_2(%arg0: i32, %arg1: i32, %arg2: memref<2x7xi32, #tpu.memory_space<smem>>, %arg3: memref<2x7xi32, #tpu.memory_space<smem>>, %arg4: memref<2xi32, #tpu.memory_space<smem>>) -> (i32, i32) {
    %c0_i32 = arith.constant 0 : i32
    %c0_i32_0 = arith.constant 0 : i32
    %c0_i32_1 = arith.constant 0 : i32
    return %c0_i32, %c0_i32_0 : i32, i32
  }
  func.func @transform_3(%arg0: i32, %arg1: i32, %arg2: memref<2x7xi32, #tpu.memory_space<smem>>, %arg3: memref<2x7xi32, #tpu.memory_space<smem>>, %arg4: memref<2xi32, #tpu.memory_space<smem>>) -> (i32, i32) {
    %c0_i32 = arith.constant 0 : i32
    %c0_i32_0 = arith.constant 0 : i32
    return %arg0, %c0_i32 : i32, i32
  }
}

module attributes {stable_mosaic.version = 11 : i64} {
  func.func @xw_kernel(%arg0: i32, %arg1: i32, %arg2: memref<128x128xbf16, #tpu.memory_space<vmem>>, %arg3: memref<1x128x128xbf16, #tpu.memory_space<vmem>>, %arg4: memref<128x128xbf16, #tpu.memory_space<vmem>>) attributes {dimension_semantics = [#tpu.dimension_semantics<parallel>, #tpu.dimension_semantics<arbitrary>], iteration_bounds = array<i64: 1, 7>, scalar_prefetch = 0 : i64, scratch_operands = 0 : i64, tpu.core_type = #tpu.core_type<tc>, window_params = [{transform_indices = @transform_0, window_bounds = array<i64: 128, 128>}, {transform_indices = @transform_1, window_bounds = array<i64: 1, 128, 128>}, {transform_indices = @transform_2, window_bounds = array<i64: 128, 128>}]} {
    %c0 = arith.constant 0 : index
    %c0_0 = arith.constant 0 : index
    %0 = vector.load %arg2[%c0, %c0_0] : memref<128x128xbf16, #tpu.memory_space<vmem>>, vector<128x128xbf16>
    %c0_1 = arith.constant 0 : index
    %c0_2 = arith.constant 0 : index
    %c0_3 = arith.constant 0 : index
    %1 = vector.load %arg3[%c0_1, %c0_2, %c0_3] : memref<1x128x128xbf16, #tpu.memory_space<vmem>>, vector<1x128x128xbf16>
    %2 = vector.shape_cast %1 : vector<1x128x128xbf16> to vector<128x128xbf16>
    %cst = arith.constant dense<0.000000e+00> : vector<128x128xf32>
    %3 = tpu.matmul %0, %2, %cst {dimension_numbers = #tpu.dot_dimension_numbers<[1], [0], [0], [1], [0, 0, 1, 1], [], []>} : vector<128x128xbf16>, vector<128x128xbf16>, vector<128x128xf32> -> vector<128x128xf32>
    %4 = arith.truncf %3 : vector<128x128xf32> to vector<128x128xbf16>
    %c0_4 = arith.constant 0 : index
    %c0_5 = arith.constant 0 : index
    %5 = vector.load %arg4[%c0_4, %c0_5] : memref<128x128xbf16, #tpu.memory_space<vmem>>, vector<128x128xbf16>
    tpu.vector_store %arg4[%c0_4, %c0_5], %4 {strides = array<i32>} : memref<128x128xbf16, #tpu.memory_space<vmem>>, vector<128x128xbf16>,
    return
  }
  func.func @transform_0(%arg0: i32, %arg1: i32) -> (i32, i32) {
    %c0_i32 = arith.constant 0 : i32
    %c0_i32_0 = arith.constant 0 : i32
    return %arg0, %c0_i32 : i32, i32
  }
  func.func @transform_1(%arg0: i32, %arg1: i32) -> (i32, i32, i32) {
    %c0_i32 = arith.constant 0 : i32
    %c0_i32_0 = arith.constant 0 : i32
    %c0_i32_1 = arith.constant 0 : i32
    return %arg1, %c0_i32, %c0_i32_0 : i32, i32, i32
  }
  func.func @transform_2(%arg0: i32, %arg1: i32) -> (i32, i32) {
    %c1_i32 = arith.constant 1 : i32
    %0 = arith.muli %arg1, %c1_i32 : i32
    %1 = arith.addi %0, %arg0 : i32
    %c0_i32 = arith.constant 0 : i32
    %c0_i32_0 = arith.constant 0 : i32
    return %1, %c0_i32 : i32, i32
  }
}

module attributes {stable_mosaic.version = 11 : i64} {
  func.func @rgcn_agg_kernel(%arg0: i32, %arg1: i32, %arg2: memref<2x7xi32, #tpu.memory_space<smem>>, %arg3: memref<2x7xi32, #tpu.memory_space<smem>>, %arg4: memref<2xi32, #tpu.memory_space<smem>>, %arg5: memref<1x64x128xbf16, #tpu.memory_space<vmem>>, %arg6: memref<896x128xbf16, #tpu.memory_space<vmem>>, %arg7: memref<3x128xf32, #tpu.memory_space<vmem>>, %arg8: memref<64x128xf32, #tpu.memory_space<vmem>>) attributes {dimension_semantics = [#tpu.dimension_semantics<parallel>, #tpu.dimension_semantics<arbitrary>], iteration_bounds = array<i64: 2, 7>, scalar_prefetch = 3 : i64, scratch_operands = 0 : i64, tpu.core_type = #tpu.core_type<tc>, window_params = [{transform_indices = @transform_0, window_bounds = array<i64: 1, 64, 128>}, {pipeline_mode = #tpu.pipeline_mode<synchronous>, transform_indices = @transform_1, window_bounds = array<i64: 896, 128>}, {pipeline_mode = #tpu.pipeline_mode<synchronous>, transform_indices = @transform_2, window_bounds = array<i64: 3, 128>}, {transform_indices = @transform_3, window_bounds = array<i64: 64, 128>}]} {
    %c0_i32 = arith.constant 0 : i32
    %0 = arith.cmpi eq, %arg1, %c0_i32 : i32
    %1 = arith.extui %0 : i1 to i32
    %c0_i32_0 = arith.constant 0 : i32
    %2 = arith.cmpi ne, %1, %c0_i32_0 : i32
    scf.if %2 {
      %cst = arith.constant 0.000000e+00 : f32
      %11 = vector.broadcast %cst : f32 to vector<64x128xf32>
      %c0 = arith.constant 0 : index
      %c0_3 = arith.constant 0 : index
      %12 = vector.load %arg8[%c0, %c0_3] : memref<64x128xf32, #tpu.memory_space<vmem>>, vector<64x128xf32>
      tpu.vector_store %arg8[%c0, %c0_3], %11 {strides = array<i32>} : memref<64x128xf32, #tpu.memory_space<vmem>>, vector<64x128xf32>,
    } else {
    }
    %3 = arith.index_cast %arg0 : i32 to index
    %4 = memref.load %arg4[%3] : memref<2xi32, #tpu.memory_space<smem>>
    %5 = arith.cmpi slt, %arg1, %4 : i32
    %6 = arith.extui %5 : i1 to i32
    %c0_i32_1 = arith.constant 0 : i32
    %7 = arith.cmpi ne, %6, %c0_i32_1 : i32
    scf.if %7 {
      %11 = arith.index_cast %arg0 : i32 to index
      %12 = arith.index_cast %arg1 : i32 to index
      %13 = memref.load %arg3[%11, %12] : memref<2x7xi32, #tpu.memory_space<smem>>
      %c128_i32 = arith.constant 128 : i32
      %14 = arith.muli %13, %c128_i32 : i32
      %15 = tpu.assume_multiple %14, 128 : i32
      %16 = arith.index_cast %15 : i32 to index
      %c0 = arith.constant 0 : index
      %17 = vector.load %arg6[%16, %c0] : memref<896x128xbf16, #tpu.memory_space<vmem>>, vector<128x128xbf16>
      %c0_3 = arith.constant 0 : index
      %c0_4 = arith.constant 0 : index
      %18 = vector.load %arg8[%c0_3, %c0_4] : memref<64x128xf32, #tpu.memory_space<vmem>>, vector<64x128xf32>
      %c0_5 = arith.constant 0 : index
      %c0_6 = arith.constant 0 : index
      %c0_7 = arith.constant 0 : index
      %19 = vector.load %arg5[%c0_5, %c0_6, %c0_7] : memref<1x64x128xbf16, #tpu.memory_space<vmem>>, vector<1x64x128xbf16>
      %20 = vector.shape_cast %19 : vector<1x64x128xbf16> to vector<64x128xbf16>
      %cst = arith.constant dense<0.000000e+00> : vector<64x128xf32>
      %21 = tpu.matmul %20, %17, %cst {dimension_numbers = #tpu.dot_dimension_numbers<[1], [0], [0], [1], [0, 0, 1, 1], [], []>} : vector<64x128xbf16>, vector<128x128xbf16>, vector<64x128xf32> -> vector<64x128xf32>
      %22 = arith.addf %18, %21 : vector<64x128xf32>
      %c0_8 = arith.constant 0 : index
      %c0_9 = arith.constant 0 : index
      %23 = vector.load %arg8[%c0_8, %c0_9] : memref<64x128xf32, #tpu.memory_space<vmem>>, vector<64x128xf32>
      tpu.vector_store %arg8[%c0_8, %c0_9], %22 {strides = array<i32>} : memref<64x128xf32, #tpu.memory_space<vmem>>, vector<64x128xf32>,
    } else {
    }
    %c6_i32 = arith.constant 6 : i32
    %8 = arith.cmpi eq, %arg1, %c6_i32 : i32
    %9 = arith.extui %8 : i1 to i32
    %c0_i32_2 = arith.constant 0 : i32
    %10 = arith.cmpi ne, %9, %c0_i32_2 : i32
    scf.if %10 {
      %c0 = arith.constant 0 : index
      %c0_3 = arith.constant 0 : index
      %11 = vector.load %arg8[%c0, %c0_3] : memref<64x128xf32, #tpu.memory_space<vmem>>, vector<64x128xf32>
      %c0_4 = arith.constant 0 : index
      %c0_5 = arith.constant 0 : index
      %12 = vector.load %arg7[%c0_4, %c0_5] : memref<3x128xf32, #tpu.memory_space<vmem>>, vector<1x128xf32>
      %13 = vector.broadcast %12 : vector<1x128xf32> to vector<64x128xf32>
      %14 = arith.addf %11, %13 : vector<64x128xf32>
      %15 = tpu.iota {dimensions = array<i32: 1>} : vector<64x128xi32>
      %c8_i32 = arith.constant 8 : i32
      %16 = vector.broadcast %c8_i32 : i32 to vector<64x128xi32>
      %17 = arith.cmpi slt, %15, %16 : vector<64x128xi32>
      %cst = arith.constant 0.000000e+00 : f32
      %18 = vector.broadcast %cst : f32 to vector<64x128xf32>
      %19 = arith.select %17, %14, %18 : vector<64x128xi1>, vector<64x128xf32>
      %cst_6 = arith.constant dense<0.000000e+00> : vector<64xf32>
      %20 = vector.multi_reduction <add>, %19, %cst_6 [1] : vector<64x128xf32> to vector<64xf32>
      %21 = vector.shape_cast %20 : vector<64xf32> to vector<64x1xf32>
      %cst_7 = arith.constant 1.250000e-01 : f32
      %22 = vector.broadcast %cst_7 : f32 to vector<64x1xf32>
      %23 = arith.mulf %21, %22 : vector<64x1xf32>
      %24 = vector.broadcast %23 : vector<64x1xf32> to vector<64x128xf32>
      %25 = arith.subf %14, %24 : vector<64x128xf32>
      %cst_8 = arith.constant 0.000000e+00 : f32
      %26 = vector.broadcast %cst_8 : f32 to vector<64x128xf32>
      %27 = arith.select %17, %25, %26 : vector<64x128xi1>, vector<64x128xf32>
      %28 = arith.mulf %27, %27 : vector<64x128xf32>
      %cst_9 = arith.constant dense<0.000000e+00> : vector<64xf32>
      %29 = vector.multi_reduction <add>, %28, %cst_9 [1] : vector<64x128xf32> to vector<64xf32>
      %30 = vector.shape_cast %29 : vector<64xf32> to vector<64x1xf32>
      %cst_10 = arith.constant 1.250000e-01 : f32
      %31 = vector.broadcast %cst_10 : f32 to vector<64x1xf32>
      %32 = arith.mulf %30, %31 : vector<64x1xf32>
      %cst_11 = arith.constant 9.99999974E-6 : f32
      %33 = vector.broadcast %cst_11 : f32 to vector<64x1xf32>
      %34 = arith.addf %32, %33 : vector<64x1xf32>
      %35 = math.rsqrt %34 : vector<64x1xf32>
      %36 = vector.broadcast %35 : vector<64x1xf32> to vector<64x128xf32>
      %37 = arith.mulf %27, %36 : vector<64x128xf32>
      %c1 = arith.constant 1 : index
      %c0_12 = arith.constant 0 : index
      %38 = vector.load %arg7[%c1, %c0_12] : memref<3x128xf32, #tpu.memory_space<vmem>>, vector<1x128xf32>
      %39 = vector.broadcast %38 : vector<1x128xf32> to vector<64x128xf32>
      %40 = arith.mulf %37, %39 : vector<64x128xf32>
      %c2 = arith.constant 2 : index
      %c0_13 = arith.constant 0 : index
      %41 = vector.load %arg7[%c2, %c0_13] : memref<3x128xf32, #tpu.memory_space<vmem>>, vector<1x128xf32>
      %42 = vector.broadcast %41 : vector<1x128xf32> to vector<64x128xf32>
      %43 = arith.addf %40, %42 : vector<64x128xf32>
      %cst_14 = arith.constant 0.000000e+00 : f32
      %44 = vector.broadcast %cst_14 : f32 to vector<64x128xf32>
      %45 = arith.select %17, %43, %44 : vector<64x128xi1>, vector<64x128xf32>
      %c0_15 = arith.constant 0 : index
      %c0_16 = arith.constant 0 : index
      %46 = vector.load %arg8[%c0_15, %c0_16] : memref<64x128xf32, #tpu.memory_space<vmem>>, vector<64x128xf32>
      tpu.vector_store %arg8[%c0_15, %c0_16], %45 {strides = array<i32>} : memref<64x128xf32, #tpu.memory_space<vmem>>, vector<64x128xf32>,
    } else {
    }
    return
  }
  func.func @transform_0(%arg0: i32, %arg1: i32, %arg2: memref<2x7xi32, #tpu.memory_space<smem>>, %arg3: memref<2x7xi32, #tpu.memory_space<smem>>, %arg4: memref<2xi32, #tpu.memory_space<smem>>) -> (i32, i32, i32) {
    %0 = arith.index_cast %arg0 : i32 to index
    %1 = arith.index_cast %arg1 : i32 to index
    %2 = memref.load %arg2[%0, %1] : memref<2x7xi32, #tpu.memory_space<smem>>
    %c0_i32 = arith.constant 0 : i32
    %c0_i32_0 = arith.constant 0 : i32
    %c0_i32_1 = arith.constant 0 : i32
    return %2, %c0_i32, %c0_i32_0 : i32, i32, i32
  }
  func.func @transform_1(%arg0: i32, %arg1: i32, %arg2: memref<2x7xi32, #tpu.memory_space<smem>>, %arg3: memref<2x7xi32, #tpu.memory_space<smem>>, %arg4: memref<2xi32, #tpu.memory_space<smem>>) -> (i32, i32) {
    %c0_i32 = arith.constant 0 : i32
    %c0_i32_0 = arith.constant 0 : i32
    %c0_i32_1 = arith.constant 0 : i32
    return %c0_i32, %c0_i32_0 : i32, i32
  }
  func.func @transform_2(%arg0: i32, %arg1: i32, %arg2: memref<2x7xi32, #tpu.memory_space<smem>>, %arg3: memref<2x7xi32, #tpu.memory_space<smem>>, %arg4: memref<2xi32, #tpu.memory_space<smem>>) -> (i32, i32) {
    %c0_i32 = arith.constant 0 : i32
    %c0_i32_0 = arith.constant 0 : i32
    %c0_i32_1 = arith.constant 0 : i32
    return %c0_i32, %c0_i32_0 : i32, i32
  }
  func.func @transform_3(%arg0: i32, %arg1: i32, %arg2: memref<2x7xi32, #tpu.memory_space<smem>>, %arg3: memref<2x7xi32, #tpu.memory_space<smem>>, %arg4: memref<2xi32, #tpu.memory_space<smem>>) -> (i32, i32) {
    %c0_i32 = arith.constant 0 : i32
    %c0_i32_0 = arith.constant 0 : i32
    return %arg0, %c0_i32 : i32, i32
  }
}

</mosaic_0001>

<llo_original>
// kernel: forward.4
$region0: #{forward.4}
  #allocation0 [shape = 'u32[]', space=smem, size = 0x4, offset = 0x4, fixed_abs, tag = 'smem constant byte address 0x4 - core index']
  #allocation1 [shape = 'u32[144,128]{1,0:T(1,128)}', space=vmem, size = 0x12000, scoped, tag = 'internal scratch']
  %s0 = inlined_call_operand.vmem [shape: bf16[128,32], index: 0, kind: input, shape index: {}]
  %s1 = inlined_call_operand.hbm [shape: bf16[7,32,128], index: 1, kind: input, shape index: {}]
  %s2 = inlined_call_operand.vmem [shape: bf16[896,128], index: 2, kind: output, shape index: {}]
  %s3 = sld [smem:[#allocation0]]
  $region45: #{forward.4} parent=0
    _
  %s5 = ssub.s32 1, %s3
  %s6 = scalar_select 0, %s5, %s3
  $region1: #{forward.4} parent=0
    #allocation2 [shape = 'u8[16384]{0}', space=vmem, size = 0x4000, scoped, tag = 'input window, operand 1']
    #allocation3 [shape = 's32[2]{0}', space=sflag, size = 0x8, scoped, tag = 'scoped memory for forward.4']
    %7 = vsyncpa [#allocation3], 0
    %s8 = scalar_lea.sflag [#allocation3], 1
    %9 = vsyncpa %s8, 0
    loop: start=0, step=1, limit=9
    $region2: #{forward.4} parent=1 // loop_pre_header
      _
    $region3: #{forward.4} parent=1 // loop_header
      %s11 = sphi 0, %s15
      %p12 = scmp.ge.s32.totalorder %s11, 9
      %s18 = sphi 0, %s30
      %s19 = sphi 0, %s26
      %s20 = sphi 0, %s18
      %s21 = sphi 0, %s19
      %s22 = sphi 0, %s20
      %s23 = sphi 0, %s21
      %s33 = sphi 0, %s35
      %s36 = sphi 0, %s33
      %s37 = sphi 0, %s36
      %s53 = sphi 0, %s37
      %s59 = sphi 0, %s61
      %s62 = sphi 0, %s59
      %s63 = sphi 0, %s62
      %s79 = sphi 0, %s63
      %s87 = sphi 0, %s89
      %s90 = sphi 0, %s87
      %s91 = sphi 0, %s90
      %s107 = sphi 0, %s91
    $region4: #{forward.4} parent=1 // loop_header_branch
      %14 = sbr.rel (%p12) target = $region8
    $region5: #{forward.4} parent=1 // loop_body
      %s16 = ssub.s32 %s11, 1
      %s17 = ssub.s32 %s11, 2
      %s24 = sadd.s32 1, %s19
      %p25 = scmp.ge.s32.totalorder %s24, 7
      %s26 = scalar_select %p25, 0, %s24
      %s27 = sadd.s32 1, %s18
      %s28 = scalar_select %p25, %s27, %s18
      %p29 = scmp.ge.s32.totalorder %s28, 1
      %s30 = scalar_select %p29, 0, %s28
      %s31 = ssub.s32 %s18, %s30
      %p32 = scmp.eq.s32.totalorder %s31, 0
      %s34 = sadd.s32 %s33, 1
      %s35 = scalar_select %p32, %s33, %s34
      %p38 = pneg %p32
      %p39 = scmp.eq.s32.totalorder %s11, 6
      %p40 = por %p38, %p39
      %p41 = scmp.ne.s32.totalorder %s33, %s36
      %p42 = scmp.eq.s32.totalorder %s11, 0
      %p43 = por %p41, %p42
      %p44 = scmp.ne.s32.totalorder %s33, %s36
      %p45 = scmp.eq.s32.totalorder %s16, 6
      %p46 = por %p44, %p45
      %p47 = scmp.ne.s32.totalorder %s36, %s37
      %p48 = scmp.eq.s32.totalorder %s16, 0
      %p49 = por %p47, %p48
      %p50 = scmp.ne.s32.totalorder %s36, %s37
      %p51 = scmp.eq.s32.totalorder %s17, 6
      %p52 = por %p50, %p51
      %p54 = scmp.ne.s32.totalorder %s37, %s53
      %p55 = scmp.eq.s32.totalorder %s17, 0
      %p56 = por %p54, %p55
      %s57 = ssub.s32 %s19, %s26
      %p58 = scmp.eq.s32.totalorder %s57, 0
      %s60 = sadd.s32 %s59, 1
      %s61 = scalar_select %p58, %s59, %s60
      %p64 = pneg %p58
      %p65 = scmp.eq.s32.totalorder %s11, 6
      %p66 = por %p64, %p65
      %p67 = scmp.ne.s32.totalorder %s59, %s62
      %p68 = scmp.eq.s32.totalorder %s11, 0
      %p69 = por %p67, %p68
      %p70 = scmp.ne.s32.totalorder %s59, %s62
      %p71 = scmp.eq.s32.totalorder %s16, 6
      %p72 = por %p70, %p71
      %p73 = scmp.ne.s32.totalorder %s62, %s63
      %p74 = scmp.eq.s32.totalorder %s16, 0
      %p75 = por %p73, %p74
      %p76 = scmp.ne.s32.totalorder %s62, %s63
      %p77 = scmp.eq.s32.totalorder %s17, 6
      %p78 = por %p76, %p77
      %p80 = scmp.ne.s32.totalorder %s63, %s79
      %p81 = scmp.eq.s32.totalorder %s17, 0
      %p82 = por %p80, %p81
      %s83 = sadd.s32 %s19, %s18
      %s84 = sadd.s32 %s26, %s30
      %s85 = ssub.s32 %s83, %s84
      %p86 = scmp.eq.s32.totalorder %s85, 0
      %s88 = sadd.s32 %s87, 1
      %s89 = scalar_select %p86, %s87, %s88
      %p92 = pneg %p86
      %p93 = scmp.eq.s32.totalorder %s11, 6
      %p94 = por %p92, %p93
      %p95 = scmp.ne.s32.totalorder %s87, %s90
      %p96 = scmp.eq.s32.totalorder %s11, 0
      %p97 = por %p95, %p96
      %p98 = scmp.ne.s32.totalorder %s87, %s90
      %p99 = scmp.eq.s32.totalorder %s16, 6
      %p100 = por %p98, %p99
      %p101 = scmp.ne.s32.totalorder %s90, %s91
      %p102 = scmp.eq.s32.totalorder %s16, 0
      %p103 = por %p101, %p102
      %p104 = scmp.ne.s32.totalorder %s90, %s91
      %p105 = scmp.eq.s32.totalorder %s17, 6
      %p106 = por %p104, %p105
      %p108 = scmp.ne.s32.totalorder %s91, %s107
      %p109 = scmp.eq.s32.totalorder %s17, 0
      %p110 = por %p108, %p109
      %p111 = scmp.le.s32.totalorder 1, %s11
      %p112 = scmp.lt.s32.totalorder %s11, 8
      %p113 = pnand %p111, %p112
      %p114 = pneg %p113
      // Predicated region
      $region9: #{forward.4} parent=5 // pred_check
        _
      $region10: #{forward.4} parent=5 // pred_check_branch
        %116 = sbr.rel (%p113) target = $region12
      $region11: #{forward.4} parent=5 // pred_region
        %s117 = ssub.s32 %s11, 1
        // Predicated region
        $region13: #{forward.4} parent=11 // pred_check
          %p118 = pneg %p49
        $region14: #{forward.4} parent=11 // pred_check_branch
          %120 = sbr.rel (%p118) target = $region16
        $region15: #{forward.4} parent=11 // pred_region
          %s121 = smul.u32 16, %s20
          %p122 = scmp.lt.s32.totalorder %s121, 15
          %s123 = scalar_select %p122, %s121, 15
          %s124 = smul.addr %s123, 4
          %s125 = scalar_lea.vmem %s0, %s124
          %s126 = smul.u32 16, %s20
        $region16: #{forward.4} parent=11 // pred_fallthru
          _
      $region12: #{forward.4} parent=5 // pred_fallthru
        _
      %p127 = scmp.lt.s32.totalorder %s11, 7
      // Predicated region
      $region17: #{forward.4} parent=5 // pred_check
        %p128 = pneg %p127
      $region18: #{forward.4} parent=5 // pred_check_branch
        %130 = sbr.rel (%p128) target = $region20
      $region19: #{forward.4} parent=5 // pred_region
        // Predicated region
        $region21: #{forward.4} parent=19 // pred_check
          %p131 = pneg %p69
        $region22: #{forward.4} parent=19 // pred_check_branch
          %133 = sbr.rel (%p131) target = $region24
        $region23: #{forward.4} parent=19 // pred_region
          %s134 = sand.u32 %s59, 1
          %s135 = scalar_lea.sflag [#allocation3], %s134
          %s136 = sand.u32 %s59, 1
          %s137 = smul.addr %s136, 16
          %s138 = scalar_lea.vmem [#allocation2], %s137
          %s140 = ssub.s32 256, 256
          %141 = vsyncadd %s135, %s140
          %s142 = smul.addr %s19, 4
          %s143 = smul.addr %s142, 64
          %s144 = scalar_lea.hbm %s1, %s143
          %s145 = sshll.u32 %s138, 4
          %s146 = int_to_ptr.vmem [resolvable:$true] %s145
          %151 = dma.hbm_to_vmem [thread:$0]  %s144, 256, %s146, %s135, 64, 64, 4
        $region24: #{forward.4} parent=19 // pred_fallthru
          _
      $region20: #{forward.4} parent=5 // pred_fallthru
        _
      %p152 = scmp.le.s32.totalorder 1, %s11
      %p153 = scmp.lt.s32.totalorder %s11, 8
      %p154 = pnand %p152, %p153
      %p155 = pneg %p154
      // Predicated region
      $region25: #{forward.4} parent=5 // pred_check
        _
      $region26: #{forward.4} parent=5 // pred_check_branch
        %157 = sbr.rel (%p154) target = $region28
      $region27: #{forward.4} parent=5 // pred_region
        %s158 = ssub.s32 %s11, 1
        %s159 = sand.u32 %s62, 1
        %s160 = scalar_lea.sflag [#allocation3], %s159
        %s161 = sand.u32 %s62, 1
        %s162 = smul.addr %s161, 16
        %s163 = scalar_lea.vmem [#allocation2], %s162
        // Predicated region
        $region29: #{forward.4} parent=27 // pred_check
          %p164 = pneg %p75
        $region30: #{forward.4} parent=27 // pred_check_branch
          %166 = sbr.rel (%p164) target = $region32
        $region31: #{forward.4} parent=27 // pred_region
          %167 = dma.done %s160, 256
        $region32: #{forward.4} parent=27 // pred_fallthru
          _
        %s168 = smul.u32 16, %s20
        %p169 = scmp.lt.s32.totalorder %s168, 15
        %s170 = scalar_select %p169, %s168, 15
        %s171 = smul.addr %s170, 4
        %s172 = scalar_lea.vmem %s0, %s171
        %p173 = pneg %p49
        %p174 = pneg %p46
        %s175 = sand.u32 %s62, 1
        %s176 = scalar_lea.sflag [#allocation3], %s175
        %s177 = sand.u32 %s62, 1
        %s178 = smul.addr %s177, 16
        %s179 = scalar_lea.vmem [#allocation2], %s178
        %p180 = pneg %p75
        %p181 = pneg %p72
        %p182 = pneg %p103
        %p183 = pneg %p100
        %s184 = sadd.s32 %s21, %s20
        %s185 = smul.u32 16, %s184
        %p186 = scmp.lt.s32.totalorder %s185, 111
        %s187 = scalar_select %p186, %s185, 111
        %s188 = smul.addr %s187, 4
        %s189 = scalar_lea.vmem %s2, %s188
        %s190 = smul.u32 16, %s20
        %p191 = scmp.lt.s32.totalorder %s190, 15
        %s192 = scalar_select %p191, %s190, 15
        %s193 = smul.addr %s192, 4
        %s194 = scalar_lea.vmem %s0, %s193
        %s195 = smul.u32 16, %s20
        %s196 = sadd.s32 %s21, %s20
        %s197 = smul.u32 16, %s196
        %p198 = scmp.lt.s32.totalorder %s197, 111
        %s199 = scalar_select %p198, %s197, 111
        %s200 = smul.addr %s199, 4
        %s201 = scalar_lea.vmem %s2, %s200
        %s202 = sadd.s32 %s21, %s20
        %s203 = smul.u32 16, %s202
        %v205 = vld [vmem:[%s194] sm:$0xf]
        %v206 = vld [vmem:[%s194 + $0x4] sm:$0xf]
        %v207 = vld [vmem:[%s194 + $0x8] sm:$0xf]
        %v208 = vld [vmem:[%s194 + $0xc] sm:$0xf]
        %v209 = vld [vmem:[%s194 + $0x10] sm:$0xf]
        %v210 = vld [vmem:[%s194 + $0x14] sm:$0xf]
        %v211 = vld [vmem:[%s194 + $0x18] sm:$0xf]
        %v212 = vld [vmem:[%s194 + $0x1c] sm:$0xf]
        %v213 = vld [vmem:[%s194 + $0x20] sm:$0xf]
        %v214 = vld [vmem:[%s194 + $0x24] sm:$0xf]
        %v215 = vld [vmem:[%s194 + $0x28] sm:$0xf]
        %v216 = vld [vmem:[%s194 + $0x2c] sm:$0xf]
        %v217 = vld [vmem:[%s194 + $0x30] sm:$0xf]
        %v218 = vld [vmem:[%s194 + $0x34] sm:$0xf]
        %v219 = vld [vmem:[%s194 + $0x38] sm:$0xf]
        %v220 = vld [vmem:[%s194 + $0x3c] sm:$0xf]
        %v221 = vld [vmem:[%s163] sm:$0xf]
        %v222 = vld [vmem:[%s163 + $0x4] sm:$0xf]
        %v223 = vld [vmem:[%s163 + $0x8] sm:$0xf]
        %v224 = vld [vmem:[%s163 + $0xc] sm:$0xf]
        %v241 = vunpack.c.l.b16 %v205
        %v242 = vunpack.c.l.b16 %v206
        %v243 = vunpack.c.l.b16 %v207
        %v244 = vunpack.c.l.b16 %v208
        %v245 = vunpack.c.l.b16 %v209
        %v246 = vunpack.c.l.b16 %v210
        %v247 = vunpack.c.l.b16 %v211
        %v248 = vunpack.c.l.b16 %v212
        %v249 = vunpack.c.l.b16 %v213
        %v250 = vunpack.c.l.b16 %v214
        %v251 = vunpack.c.l.b16 %v215
        %v252 = vunpack.c.l.b16 %v216
        %v253 = vunpack.c.l.b16 %v217
        %v254 = vunpack.c.l.b16 %v218
        %v255 = vunpack.c.l.b16 %v219
        %v256 = vunpack.c.l.b16 %v220
        %v257 = vpack.c.b16 %v242, %v241
        %v258 = vpack.c.b16 %v244, %v243
        %v259 = vpack.c.b16 %v246, %v245
        %v260 = vpack.c.b16 %v248, %v247
        %v261 = vpack.c.b16 %v250, %v249
        %v262 = vpack.c.b16 %v252, %v251
        %v263 = vpack.c.b16 %v254, %v253
        %v264 = vpack.c.b16 %v256, %v255
        %v269 = vunpack.c.l.b16 %v221
        %v270 = vunpack.c.l.b16 %v222
        %v271 = vunpack.c.l.b16 %v223
        %v272 = vunpack.c.l.b16 %v224
        %v273 = vpack.c.b16 %v270, %v269
        %v274 = vpack.c.b16 %v272, %v271
        %vm277 = vcmask 261120
        %v279 = vsel %vm277, %v257, 0
        %v282 = vsel %vm277, %v258, 0
        %v285 = vsel %vm277, %v259, 0
        %v288 = vsel %vm277, %v260, 0
        %v291 = vsel %vm277, %v261, 0
        %v294 = vsel %vm277, %v262, 0
        %v297 = vsel %vm277, %v263, 0
        %v300 = vsel %vm277, %v264, 0
        %302 = vmatprep.subr.bf16.mxu0 0
        %303 = vmatpush1.bf16.msra.mxu0 %v273
        %304 = vmatprep.subr.bf16.mxu0 0
        %305 = vmatpush1.bf16.msra.mxu0 %v274
        %306 = vmatprep.subr.bf16.mxu0 0
        %307 = vmatpush1.bf16.msra.mxu0 0
        %308 = vmatprep.subr.bf16.mxu0 0
        %309 = vmatpush1.bf16.msra.mxu0 0
        %310 = vmatprep.subr.bf16.mxu0 0
        %311 = vmatpush1.bf16.msra.mxu0 0
        %312 = vmatprep.subr.bf16.mxu0 0
        %313 = vmatpush1.bf16.msra.mxu0 0
        %314 = vmatprep.subr.bf16.mxu0 0
        %315 = vmatpush1.bf16.msra.mxu0 0
        %316 = vmatprep.subr.bf16.mxu0 0
        %317 = vmatpush1.bf16.msra.mxu0 0
        %318 = vmatprep.subr.bf16.mxu0 0
        %319 = vmatpush1.bf16.msra.mxu0 0
        %320 = vmatprep.subr.bf16.mxu0 0
        %321 = vmatpush1.bf16.msra.mxu0 0
        %322 = vmatprep.subr.bf16.mxu0 0
        %323 = vmatpush1.bf16.msra.mxu0 0
        %324 = vmatprep.subr.bf16.mxu0 0
        %325 = vmatpush1.bf16.msra.mxu0 0
        %326 = vmatprep.subr.bf16.mxu0 0
        %327 = vmatpush1.bf16.msra.mxu0 0
        %328 = vmatprep.subr.bf16.mxu0 0
        %329 = vmatpush1.bf16.msra.mxu0 0
        %330 = vmatprep.subr.bf16.mxu0 0
        %331 = vmatpush1.bf16.msra.mxu0 0
        %332 = vmatprep.subr.bf16.mxu0 0
        %333 = vmatpush1.bf16.msra.mxu0 0
        %334 = vmatprep.mubr.bf16.mxu0 0
        %335 = vmatmul.mubr.bf16.gmra.mrb[0].mxu0 %v279
        %v336 = vpop.f32.mrb[0].mxu0
        %v337 = vadd.f32 0.0, %v336
        %v338 = vpop.f32.mrb[0].mxu0
        %v339 = vpop.f32.mrb[0].mxu0
        %v340 = vadd.f32 0.0, %v339
        %v341 = vpop.f32.mrb[0].mxu0
        %342 = vmatprep.mubr.bf16.mxu0 0
        %343 = vmatmul.mubr.bf16.gmra.mrb[0].mxu0 %v282
        %v344 = vpop.f32.mrb[0].mxu0
        %v345 = vadd.f32 0.0, %v344
        %v346 = vpop.f32.mrb[0].mxu0
        %v347 = vpop.f32.mrb[0].mxu0
        %v348 = vadd.f32 0.0, %v347
        %v349 = vpop.f32.mrb[0].mxu0
        %350 = vmatprep.mubr.bf16.mxu0 0
        %351 = vmatmul.mubr.bf16.gmra.mrb[0].mxu0 %v285
        %v352 = vpop.f32.mrb[0].mxu0
        %v353 = vadd.f32 0.0, %v352
        %v354 = vpop.f32.mrb[0].mxu0
        %v355 = vpop.f32.mrb[0].mxu0
        %v356 = vadd.f32 0.0, %v355
        %v357 = vpop.f32.mrb[0].mxu0
        %358 = vmatprep.mubr.bf16.mxu0 0
        %359 = vmatmul.mubr.bf16.gmra.mrb[0].mxu0 %v288
        %v360 = vpop.f32.mrb[0].mxu0
        %v361 = vadd.f32 0.0, %v360
        %v362 = vpop.f32.mrb[0].mxu0
        %v363 = vpop.f32.mrb[0].mxu0
        %v364 = vadd.f32 0.0, %v363
        %v365 = vpop.f32.mrb[0].mxu0
        %366 = vmatprep.mubr.bf16.mxu0 0
        %367 = vmatmul.mubr.bf16.gmra.mrb[0].mxu0 %v291
        %v368 = vpop.f32.mrb[0].mxu0
        %v369 = vadd.f32 0.0, %v368
        %v370 = vpop.f32.mrb[0].mxu0
        %v371 = vpop.f32.mrb[0].mxu0
        %v372 = vadd.f32 0.0, %v371
        %v373 = vpop.f32.mrb[0].mxu0
        %374 = vmatprep.mubr.bf16.mxu0 0
        %375 = vmatmul.mubr.bf16.gmra.mrb[0].mxu0 %v294
        %v376 = vpop.f32.mrb[0].mxu0
        %v377 = vadd.f32 0.0, %v376
        %v378 = vpop.f32.mrb[0].mxu0
        %v379 = vpop.f32.mrb[0].mxu0
        %v380 = vadd.f32 0.0, %v379
        %v381 = vpop.f32.mrb[0].mxu0
        %382 = vmatprep.mubr.bf16.mxu0 0
        %383 = vmatmul.mubr.bf16.gmra.mrb[0].mxu0 %v297
        %v384 = vpop.f32.mrb[0].mxu0
        %v385 = vadd.f32 0.0, %v384
        %v386 = vpop.f32.mrb[0].mxu0
        %v387 = vpop.f32.mrb[0].mxu0
        %v388 = vadd.f32 0.0, %v387
        %v389 = vpop.f32.mrb[0].mxu0
        %390 = vmatprep.mubr.bf16.mxu0 0
        %391 = vmatmul.mubr.bf16.gmra.mrb[0].mxu0 %v300
        %v392 = vpop.f32.mrb[0].mxu0
        %v393 = vadd.f32 0.0, %v392
        %v394 = vpop.f32.mrb[0].mxu0
        %v395 = vpop.f32.mrb[0].mxu0
        %v396 = vadd.f32 0.0, %v395
        %v397 = vpop.f32.mrb[0].mxu0
        %398 = vdwg.mxu0
        %v399 = vpack.c.bf16 %v340, %v337
        %v400 = vpack.c.bf16 %v348, %v345
        %v401 = vpack.c.bf16 %v356, %v353
        %v402 = vpack.c.bf16 %v364, %v361
        %v403 = vpack.c.bf16 %v372, %v369
        %v404 = vpack.c.bf16 %v380, %v377
        %v405 = vpack.c.bf16 %v388, %v385
        %v406 = vpack.c.bf16 %v396, %v393
        %v415 = vunpack.c.l.b16 %v399
        %v416 = vunpack.c.h.b16 %v399
        %v417 = vunpack.c.l.b16 %v400
        %v418 = vunpack.c.h.b16 %v400
        %v419 = vunpack.c.l.b16 %v401
        %v420 = vunpack.c.h.b16 %v401
        %v421 = vunpack.c.l.b16 %v402
        %v422 = vunpack.c.h.b16 %v402
        %v423 = vunpack.c.l.b16 %v403
        %v424 = vunpack.c.h.b16 %v403
        %v425 = vunpack.c.l.b16 %v404
        %v426 = vunpack.c.h.b16 %v404
        %v427 = vunpack.c.l.b16 %v405
        %v428 = vunpack.c.h.b16 %v405
        %v429 = vunpack.c.l.b16 %v406
        %v430 = vunpack.c.h.b16 %v406
        %v431 = vpack.c.b16 %v415, %v415
        %v432 = vpack.c.b16 %v416, %v416
        %v433 = vpack.c.b16 %v417, %v417
        %v434 = vpack.c.b16 %v418, %v418
        %v435 = vpack.c.b16 %v419, %v419
        %v436 = vpack.c.b16 %v420, %v420
        %v437 = vpack.c.b16 %v421, %v421
        %v438 = vpack.c.b16 %v422, %v422
        %v439 = vpack.c.b16 %v423, %v423
        %v440 = vpack.c.b16 %v424, %v424
        %v441 = vpack.c.b16 %v425, %v425
        %v442 = vpack.c.b16 %v426, %v426
        %v443 = vpack.c.b16 %v427, %v427
        %v444 = vpack.c.b16 %v428, %v428
        %v445 = vpack.c.b16 %v429, %v429
        %v446 = vpack.c.b16 %v430, %v430
        %463 = vst [vmem:[%s201] sm:$0xf] %v431
        %464 = vst [vmem:[%s201 + $0x4] sm:$0xf] %v432
        %465 = vst [vmem:[%s201 + $0x8] sm:$0xf] %v433
        %466 = vst [vmem:[%s201 + $0xc] sm:$0xf] %v434
        %467 = vst [vmem:[%s201 + $0x10] sm:$0xf] %v435
        %468 = vst [vmem:[%s201 + $0x14] sm:$0xf] %v436
        %469 = vst [vmem:[%s201 + $0x18] sm:$0xf] %v437
        %470 = vst [vmem:[%s201 + $0x1c] sm:$0xf] %v438
        %471 = vst [vmem:[%s201 + $0x20] sm:$0xf] %v439
        %472 = vst [vmem:[%s201 + $0x24] sm:$0xf] %v440
        %473 = vst [vmem:[%s201 + $0x28] sm:$0xf] %v441
        %474 = vst [vmem:[%s201 + $0x2c] sm:$0xf] %v442
        %475 = vst [vmem:[%s201 + $0x30] sm:$0xf] %v443
        %476 = vst [vmem:[%s201 + $0x34] sm:$0xf] %v444
        %477 = vst [vmem:[%s201 + $0x38] sm:$0xf] %v445
        %478 = vst [vmem:[%s201 + $0x3c] sm:$0xf] %v446
        %s479 = sadd.s32 %s21, %s20
        %s480 = smul.u32 16, %s479
        %p481 = scmp.lt.s32.totalorder %s480, 111
        %s482 = scalar_select %p481, %s480, 111
        %s483 = smul.addr %s482, 4
        %s484 = scalar_lea.vmem %s2, %s483
        // Predicated region
        $region33: #{forward.4} parent=27 // pred_check
          %p485 = pneg %p100
        $region34: #{forward.4} parent=27 // pred_check_branch
          %487 = sbr.rel (%p485) target = $region36
        $region35: #{forward.4} parent=27 // pred_region
          %s488 = sadd.s32 %s21, %s20
          %s489 = smul.u32 16, %s488
        $region36: #{forward.4} parent=27 // pred_fallthru
          _
      $region28: #{forward.4} parent=5 // pred_fallthru
        _
      %p490 = scmp.le.s32.totalorder 2, %s11
      // Predicated region
      $region37: #{forward.4} parent=5 // pred_check
        %p491 = pneg %p490
      $region38: #{forward.4} parent=5 // pred_check_branch
        %493 = sbr.rel (%p491) target = $region40
      $region39: #{forward.4} parent=5 // pred_region
        %s494 = ssub.s32 %s11, 2
        // Predicated region
        $region41: #{forward.4} parent=39 // pred_check
          %p495 = pneg %p106
        $region42: #{forward.4} parent=39 // pred_check_branch
          %497 = sbr.rel (%p495) target = $region44
        $region43: #{forward.4} parent=39 // pred_region
          %s498 = sadd.s32 %s23, %s22
          %s499 = smul.u32 16, %s498
          %p500 = scmp.lt.s32.totalorder %s499, 111
          %s501 = scalar_select %p500, %s499, 111
          %s502 = smul.addr %s501, 4
          %s503 = scalar_lea.vmem %s2, %s502
        $region44: #{forward.4} parent=39 // pred_fallthru
          _
      $region40: #{forward.4} parent=5 // pred_fallthru
        _
    $region6: #{forward.4} parent=1 // loop_footer
      %s15 = sadd.s32 1, %s11
    $region7: #{forward.4} parent=1 // loop_footer_branch
      %10 = sbr.rel target = $region3
    $region8: #{forward.4} parent=1 // loop_exit
      _
    %504 = vsyncpa [#allocation3], 1
    %s505 = scalar_lea.sflag [#allocation3], 1
    %506 = vsyncpa %s505, 1

// kernel: forward.6
$region0: #{forward.6}
  #allocation0 [shape = 'u32[]', space=smem, size = 0x4, offset = 0x4, fixed_abs, tag = 'smem constant byte address 0x4 - core index']
  #allocation1 [shape = 'u32[144,128]{1,0:T(1,128)}', space=vmem, size = 0x12000, scoped, tag = 'internal scratch']
  %s0 = inlined_call_operand.vmem [shape: bf16[128,128], index: 0, kind: input, shape index: {}]
  %s1 = inlined_call_operand.vmem [shape: bf16[7,128,128], index: 1, kind: input, shape index: {}]
  %s2 = inlined_call_operand.vmem [shape: bf16[896,128], index: 2, kind: output, shape index: {}]
  %s3 = sld [smem:[#allocation0]]
  $region41: #{forward.6} parent=0
    _
  %s5 = ssub.s32 1, %s3
  %s6 = scalar_select 0, %s5, %s3
  loop: start=0, step=1, limit=9
  $region2: #{forward.6} parent=0 // loop_pre_header
    _
  $region3: #{forward.6} parent=0 // loop_header
    %s8 = sphi 0, %s12
    %p9 = scmp.ge.s32.totalorder %s8, 9
    %s15 = sphi 0, %s27
    %s16 = sphi 0, %s23
    %s17 = sphi 0, %s15
    %s18 = sphi 0, %s16
    %s19 = sphi 0, %s17
    %s20 = sphi 0, %s18
    %s30 = sphi 0, %s32
    %s33 = sphi 0, %s30
    %s34 = sphi 0, %s33
    %s50 = sphi 0, %s34
    %s56 = sphi 0, %s58
    %s59 = sphi 0, %s56
    %s60 = sphi 0, %s59
    %s76 = sphi 0, %s60
    %s84 = sphi 0, %s86
    %s87 = sphi 0, %s84
    %s88 = sphi 0, %s87
    %s104 = sphi 0, %s88
  $region4: #{forward.6} parent=0 // loop_header_branch
    %11 = sbr.rel (%p9) target = $region8
  $region5: #{forward.6} parent=0 // loop_body
    %s13 = ssub.s32 %s8, 1
    %s14 = ssub.s32 %s8, 2
    %s21 = sadd.s32 1, %s16
    %p22 = scmp.ge.s32.totalorder %s21, 7
    %s23 = scalar_select %p22, 0, %s21
    %s24 = sadd.s32 1, %s15
    %s25 = scalar_select %p22, %s24, %s15
    %p26 = scmp.ge.s32.totalorder %s25, 1
    %s27 = scalar_select %p26, 0, %s25
    %s28 = ssub.s32 %s15, %s27
    %p29 = scmp.eq.s32.totalorder %s28, 0
    %s31 = sadd.s32 %s30, 1
    %s32 = scalar_select %p29, %s30, %s31
    %p35 = pneg %p29
    %p36 = scmp.eq.s32.totalorder %s8, 6
    %p37 = por %p35, %p36
    %p38 = scmp.ne.s32.totalorder %s30, %s33
    %p39 = scmp.eq.s32.totalorder %s8, 0
    %p40 = por %p38, %p39
    %p41 = scmp.ne.s32.totalorder %s30, %s33
    %p42 = scmp.eq.s32.totalorder %s13, 6
    %p43 = por %p41, %p42
    %p44 = scmp.ne.s32.totalorder %s33, %s34
    %p45 = scmp.eq.s32.totalorder %s13, 0
    %p46 = por %p44, %p45
    %p47 = scmp.ne.s32.totalorder %s33, %s34
    %p48 = scmp.eq.s32.totalorder %s14, 6
    %p49 = por %p47, %p48
    %p51 = scmp.ne.s32.totalorder %s34, %s50
    %p52 = scmp.eq.s32.totalorder %s14, 0
    %p53 = por %p51, %p52
    %s54 = ssub.s32 %s16, %s23
    %p55 = scmp.eq.s32.totalorder %s54, 0
    %s57 = sadd.s32 %s56, 1
    %s58 = scalar_select %p55, %s56, %s57
    %p61 = pneg %p55
    %p62 = scmp.eq.s32.totalorder %s8, 6
    %p63 = por %p61, %p62
    %p64 = scmp.ne.s32.totalorder %s56, %s59
    %p65 = scmp.eq.s32.totalorder %s8, 0
    %p66 = por %p64, %p65
    %p67 = scmp.ne.s32.totalorder %s56, %s59
    %p68 = scmp.eq.s32.totalorder %s13, 6
    %p69 = por %p67, %p68
    %p70 = scmp.ne.s32.totalorder %s59, %s60
    %p71 = scmp.eq.s32.totalorder %s13, 0
    %p72 = por %p70, %p71
    %p73 = scmp.ne.s32.totalorder %s59, %s60
    %p74 = scmp.eq.s32.totalorder %s14, 6
    %p75 = por %p73, %p74
    %p77 = scmp.ne.s32.totalorder %s60, %s76
    %p78 = scmp.eq.s32.totalorder %s14, 0
    %p79 = por %p77, %p78
    %s80 = sadd.s32 %s16, %s15
    %s81 = sadd.s32 %s23, %s27
    %s82 = ssub.s32 %s80, %s81
    %p83 = scmp.eq.s32.totalorder %s82, 0
    %s85 = sadd.s32 %s84, 1
    %s86 = scalar_select %p83, %s84, %s85
    %p89 = pneg %p83
    %p90 = scmp.eq.s32.totalorder %s8, 6
    %p91 = por %p89, %p90
    %p92 = scmp.ne.s32.totalorder %s84, %s87
    %p93 = scmp.eq.s32.totalorder %s8, 0
    %p94 = por %p92, %p93
    %p95 = scmp.ne.s32.totalorder %s84, %s87
    %p96 = scmp.eq.s32.totalorder %s13, 6
    %p97 = por %p95, %p96
    %p98 = scmp.ne.s32.totalorder %s87, %s88
    %p99 = scmp.eq.s32.totalorder %s13, 0
    %p100 = por %p98, %p99
    %p101 = scmp.ne.s32.totalorder %s87, %s88
    %p102 = scmp.eq.s32.totalorder %s14, 6
    %p103 = por %p101, %p102
    %p105 = scmp.ne.s32.totalorder %s88, %s104
    %p106 = scmp.eq.s32.totalorder %s14, 0
    %p107 = por %p105, %p106
    %p108 = scmp.le.s32.totalorder 1, %s8
    %p109 = scmp.lt.s32.totalorder %s8, 8
    %p110 = pnand %p108, %p109
    %p111 = pneg %p110
    // Predicated region
    $region9: #{forward.6} parent=5 // pred_check
      _
    $region10: #{forward.6} parent=5 // pred_check_branch
      %113 = sbr.rel (%p110) target = $region12
    $region11: #{forward.6} parent=5 // pred_region
      %s114 = ssub.s32 %s8, 1
      // Predicated region
      $region13: #{forward.6} parent=11 // pred_check
        %p115 = pneg %p46
      $region14: #{forward.6} parent=11 // pred_check_branch
        %117 = sbr.rel (%p115) target = $region16
      $region15: #{forward.6} parent=11 // pred_region
        %s118 = smul.u32 16, %s17
        %p119 = scmp.lt.s32.totalorder %s118, 15
        %s120 = scalar_select %p119, %s118, 15
        %s121 = smul.addr %s120, 4
        %s122 = scalar_lea.vmem %s0, %s121
        %s123 = smul.u32 16, %s17
      $region16: #{forward.6} parent=11 // pred_fallthru
        _
    $region12: #{forward.6} parent=5 // pred_fallthru
      _
    %p124 = scmp.lt.s32.totalorder %s8, 7
    // Predicated region
    $region17: #{forward.6} parent=5 // pred_check
      %p125 = pneg %p124
    $region18: #{forward.6} parent=5 // pred_check_branch
      %127 = sbr.rel (%p125) target = $region20
    $region19: #{forward.6} parent=5 // pred_region
      // Predicated region
      $region21: #{forward.6} parent=19 // pred_check
        %p128 = pneg %p66
      $region22: #{forward.6} parent=19 // pred_check_branch
        %130 = sbr.rel (%p128) target = $region24
      $region23: #{forward.6} parent=19 // pred_region
        %p131 = scmp.lt.s32.totalorder %s16, 6
        %s132 = scalar_select %p131, %s16, 6
        %s133 = smul.addr %s132, 16
        %s134 = smul.addr %s133, 4
        %s135 = scalar_lea.vmem %s1, %s134
      $region24: #{forward.6} parent=19 // pred_fallthru
        _
    $region20: #{forward.6} parent=5 // pred_fallthru
      _
    %p136 = scmp.le.s32.totalorder 1, %s8
    %p137 = scmp.lt.s32.totalorder %s8, 8
    %p138 = pnand %p136, %p137
    %p139 = pneg %p138
    // Predicated region
    $region25: #{forward.6} parent=5 // pred_check
      _
    $region26: #{forward.6} parent=5 // pred_check_branch
      %141 = sbr.rel (%p138) target = $region28
    $region27: #{forward.6} parent=5 // pred_region
      %s142 = ssub.s32 %s8, 1
      %s143 = smul.u32 16, %s17
      %p144 = scmp.lt.s32.totalorder %s143, 15
      %s145 = scalar_select %p144, %s143, 15
      %s146 = smul.addr %s145, 4
      %s147 = scalar_lea.vmem %s0, %s146
      %p148 = pneg %p46
      %p149 = pneg %p43
      %p150 = scmp.lt.s32.totalorder %s18, 6
      %s151 = scalar_select %p150, %s18, 6
      %s152 = smul.addr %s151, 16
      %s153 = smul.addr %s152, 4
      %s154 = scalar_lea.vmem %s1, %s153
      %p155 = pneg %p72
      %p156 = pneg %p69
      %p157 = pneg %p100
      %p158 = pneg %p97
      %s159 = sadd.s32 %s18, %s17
      %s160 = smul.u32 16, %s159
      %p161 = scmp.lt.s32.totalorder %s160, 111
      %s162 = scalar_select %p161, %s160, 111
      %s163 = smul.addr %s162, 4
      %s164 = scalar_lea.vmem %s2, %s163
      %s165 = smul.u32 16, %s17
      %p166 = scmp.lt.s32.totalorder %s165, 15
      %s167 = scalar_select %p166, %s165, 15
      %s168 = smul.addr %s167, 4
      %s169 = scalar_lea.vmem %s0, %s168
      %s170 = smul.u32 16, %s17
      %p171 = scmp.lt.s32.totalorder %s18, 6
      %s172 = scalar_select %p171, %s18, 6
      %s173 = smul.addr %s172, 16
      %s174 = smul.addr %s173, 4
      %s175 = scalar_lea.vmem %s1, %s174
      %s176 = sadd.s32 %s18, %s17
      %s177 = smul.u32 16, %s176
      %p178 = scmp.lt.s32.totalorder %s177, 111
      %s179 = scalar_select %p178, %s177, 111
      %s180 = smul.addr %s179, 4
      %s181 = scalar_lea.vmem %s2, %s180
      %s182 = sadd.s32 %s18, %s17
      %s183 = smul.u32 16, %s182
      %v185 = vld [vmem:[%s169] sm:$0xf]
      %v186 = vld [vmem:[%s169 + $0x4] sm:$0xf]
      %v187 = vld [vmem:[%s169 + $0x8] sm:$0xf]
      %v188 = vld [vmem:[%s169 + $0xc] sm:$0xf]
      %v189 = vld [vmem:[%s169 + $0x10] sm:$0xf]
      %v190 = vld [vmem:[%s169 + $0x14] sm:$0xf]
      %v191 = vld [vmem:[%s169 + $0x18] sm:$0xf]
      %v192 = vld [vmem:[%s169 + $0x1c] sm:$0xf]
      %v193 = vld [vmem:[%s169 + $0x20] sm:$0xf]
      %v194 = vld [vmem:[%s169 + $0x24] sm:$0xf]
      %v195 = vld [vmem:[%s169 + $0x28] sm:$0xf]
      %v196 = vld [vmem:[%s169 + $0x2c] sm:$0xf]
      %v197 = vld [vmem:[%s169 + $0x30] sm:$0xf]
      %v198 = vld [vmem:[%s169 + $0x34] sm:$0xf]
      %v199 = vld [vmem:[%s169 + $0x38] sm:$0xf]
      %v200 = vld [vmem:[%s169 + $0x3c] sm:$0xf]
      %v201 = vld [vmem:[%s175] sm:$0xf]
      %v202 = vld [vmem:[%s175 + $0x4] sm:$0xf]
      %v203 = vld [vmem:[%s175 + $0x8] sm:$0xf]
      %v204 = vld [vmem:[%s175 + $0xc] sm:$0xf]
      %v205 = vld [vmem:[%s175 + $0x10] sm:$0xf]
      %v206 = vld [vmem:[%s175 + $0x14] sm:$0xf]
      %v207 = vld [vmem:[%s175 + $0x18] sm:$0xf]
      %v208 = vld [vmem:[%s175 + $0x1c] sm:$0xf]
      %v209 = vld [vmem:[%s175 + $0x20] sm:$0xf]
      %v210 = vld [vmem:[%s175 + $0x24] sm:$0xf]
      %v211 = vld [vmem:[%s175 + $0x28] sm:$0xf]
      %v212 = vld [vmem:[%s175 + $0x2c] sm:$0xf]
      %v213 = vld [vmem:[%s175 + $0x30] sm:$0xf]
      %v214 = vld [vmem:[%s175 + $0x34] sm:$0xf]
      %v215 = vld [vmem:[%s175 + $0x38] sm:$0xf]
      %v216 = vld [vmem:[%s175 + $0x3c] sm:$0xf]
      %v233 = vunpack.c.l.b16 %v185
      %v234 = vunpack.c.l.b16 %v186
      %v235 = vunpack.c.l.b16 %v187
      %v236 = vunpack.c.l.b16 %v188
      %v237 = vunpack.c.l.b16 %v189
      %v238 = vunpack.c.l.b16 %v190
      %v239 = vunpack.c.l.b16 %v191
      %v240 = vunpack.c.l.b16 %v192
      %v241 = vunpack.c.l.b16 %v193
      %v242 = vunpack.c.l.b16 %v194
      %v243 = vunpack.c.l.b16 %v195
      %v244 = vunpack.c.l.b16 %v196
      %v245 = vunpack.c.l.b16 %v197
      %v246 = vunpack.c.l.b16 %v198
      %v247 = vunpack.c.l.b16 %v199
      %v248 = vunpack.c.l.b16 %v200
      %v249 = vpack.c.b16 %v234, %v233
      %v250 = vpack.c.b16 %v236, %v235
      %v251 = vpack.c.b16 %v238, %v237
      %v252 = vpack.c.b16 %v240, %v239
      %v253 = vpack.c.b16 %v242, %v241
      %v254 = vpack.c.b16 %v244, %v243
      %v255 = vpack.c.b16 %v246, %v245
      %v256 = vpack.c.b16 %v248, %v247
      %v281 = vunpack.c.l.b16 %v201
      %v282 = vunpack.c.l.b16 %v202
      %v283 = vunpack.c.l.b16 %v203
      %v284 = vunpack.c.l.b16 %v204
      %v285 = vunpack.c.l.b16 %v205
      %v286 = vunpack.c.l.b16 %v206
      %v287 = vunpack.c.l.b16 %v207
      %v288 = vunpack.c.l.b16 %v208
      %v289 = vunpack.c.l.b16 %v209
      %v290 = vunpack.c.l.b16 %v210
      %v291 = vunpack.c.l.b16 %v211
      %v292 = vunpack.c.l.b16 %v212
      %v293 = vunpack.c.l.b16 %v213
      %v294 = vunpack.c.l.b16 %v214
      %v295 = vunpack.c.l.b16 %v215
      %v296 = vunpack.c.l.b16 %v216
      %v297 = vpack.c.b16 %v282, %v281
      %v298 = vpack.c.b16 %v284, %v283
      %v299 = vpack.c.b16 %v286, %v285
      %v300 = vpack.c.b16 %v288, %v287
      %v301 = vpack.c.b16 %v290, %v289
      %v302 = vpack.c.b16 %v292, %v291
      %v303 = vpack.c.b16 %v294, %v293
      %v304 = vpack.c.b16 %v296, %v295
      %313 = vmatprep.subr.bf16.mxu0 0
      %314 = vmatpush1.bf16.msra.mxu0 %v297
      %315 = vmatprep.subr.bf16.mxu0 0
      %316 = vmatpush1.bf16.msra.mxu0 %v298
      %317 = vmatprep.subr.bf16.mxu0 0
      %318 = vmatpush1.bf16.msra.mxu0 %v299
      %319 = vmatprep.subr.bf16.mxu0 0
      %320 = vmatpush1.bf16.msra.mxu0 %v300
      %321 = vmatprep.subr.bf16.mxu0 0
      %322 = vmatpush1.bf16.msra.mxu0 %v301
      %323 = vmatprep.subr.bf16.mxu0 0
      %324 = vmatpush1.bf16.msra.mxu0 %v302
      %325 = vmatprep.subr.bf16.mxu0 0
      %326 = vmatpush1.bf16.msra.mxu0 %v303
      %327 = vmatprep.subr.bf16.mxu0 0
      %328 = vmatpush1.bf16.msra.mxu0 %v304
      %329 = vmatprep.subr.bf16.mxu0 0
      %330 = vmatpush1.bf16.msra.mxu0 0
      %331 = vmatprep.subr.bf16.mxu0 0
      %332 = vmatpush1.bf16.msra.mxu0 0
      %333 = vmatprep.subr.bf16.mxu0 0
      %334 = vmatpush1.bf16.msra.mxu0 0
      %335 = vmatprep.subr.bf16.mxu0 0
      %336 = vmatpush1.bf16.msra.mxu0 0
      %337 = vmatprep.subr.bf16.mxu0 0
      %338 = vmatpush1.bf16.msra.mxu0 0
      %339 = vmatprep.subr.bf16.mxu0 0
      %340 = vmatpush1.bf16.msra.mxu0 0
      %341 = vmatprep.subr.bf16.mxu0 0
      %342 = vmatpush1.bf16.msra.mxu0 0
      %343 = vmatprep.subr.bf16.mxu0 0
      %344 = vmatpush1.bf16.msra.mxu0 0
      %345 = vmatprep.mubr.bf16.mxu0 0
      %346 = vmatmul.mubr.bf16.gmra.mrb[0].mxu0 %v249
      %v347 = vpop.f32.mrb[0].mxu0
      %v348 = vadd.f32 0.0, %v347
      %v349 = vpop.f32.mrb[0].mxu0
      %v350 = vpop.f32.mrb[0].mxu0
      %v351 = vadd.f32 0.0, %v350
      %v352 = vpop.f32.mrb[0].mxu0
      %353 = vmatprep.mubr.bf16.mxu0 0
      %354 = vmatmul.mubr.bf16.gmra.mrb[0].mxu0 %v250
      %v355 = vpop.f32.mrb[0].mxu0
      %v356 = vadd.f32 0.0, %v355
      %v357 = vpop.f32.mrb[0].mxu0
      %v358 = vpop.f32.mrb[0].mxu0
      %v359 = vadd.f32 0.0, %v358
      %v360 = vpop.f32.mrb[0].mxu0
      %361 = vmatprep.mubr.bf16.mxu0 0
      %362 = vmatmul.mubr.bf16.gmra.mrb[0].mxu0 %v251
      %v363 = vpop.f32.mrb[0].mxu0
      %v364 = vadd.f32 0.0, %v363
      %v365 = vpop.f32.mrb[0].mxu0
      %v366 = vpop.f32.mrb[0].mxu0
      %v367 = vadd.f32 0.0, %v366
      %v368 = vpop.f32.mrb[0].mxu0
      %369 = vmatprep.mubr.bf16.mxu0 0
      %370 = vmatmul.mubr.bf16.gmra.mrb[0].mxu0 %v252
      %v371 = vpop.f32.mrb[0].mxu0
      %v372 = vadd.f32 0.0, %v371
      %v373 = vpop.f32.mrb[0].mxu0
      %v374 = vpop.f32.mrb[0].mxu0
      %v375 = vadd.f32 0.0, %v374
      %v376 = vpop.f32.mrb[0].mxu0
      %377 = vmatprep.mubr.bf16.mxu0 0
      %378 = vmatmul.mubr.bf16.gmra.mrb[0].mxu0 %v253
      %v379 = vpop.f32.mrb[0].mxu0
      %v380 = vadd.f32 0.0, %v379
      %v381 = vpop.f32.mrb[0].mxu0
      %v382 = vpop.f32.mrb[0].mxu0
      %v383 = vadd.f32 0.0, %v382
      %v384 = vpop.f32.mrb[0].mxu0
      %385 = vmatprep.mubr.bf16.mxu0 0
      %386 = vmatmul.mubr.bf16.gmra.mrb[0].mxu0 %v254
      %v387 = vpop.f32.mrb[0].mxu0
      %v388 = vadd.f32 0.0, %v387
      %v389 = vpop.f32.mrb[0].mxu0
      %v390 = vpop.f32.mrb[0].mxu0
      %v391 = vadd.f32 0.0, %v390
      %v392 = vpop.f32.mrb[0].mxu0
      %393 = vmatprep.mubr.bf16.mxu0 0
      %394 = vmatmul.mubr.bf16.gmra.mrb[0].mxu0 %v255
      %v395 = vpop.f32.mrb[0].mxu0
      %v396 = vadd.f32 0.0, %v395
      %v397 = vpop.f32.mrb[0].mxu0
      %v398 = vpop.f32.mrb[0].mxu0
      %v399 = vadd.f32 0.0, %v398
      %v400 = vpop.f32.mrb[0].mxu0
      %401 = vmatprep.mubr.bf16.mxu0 0
      %402 = vmatmul.mubr.bf16.gmra.mrb[0].mxu0 %v256
      %v403 = vpop.f32.mrb[0].mxu0
      %v404 = vadd.f32 0.0, %v403
      %v405 = vpop.f32.mrb[0].mxu0
      %v406 = vpop.f32.mrb[0].mxu0
      %v407 = vadd.f32 0.0, %v406
      %v408 = vpop.f32.mrb[0].mxu0
      %409 = vdwg.mxu0
      %v410 = vpack.c.bf16 %v351, %v348
      %v411 = vpack.c.bf16 %v359, %v356
      %v412 = vpack.c.bf16 %v367, %v364
      %v413 = vpack.c.bf16 %v375, %v372
      %v414 = vpack.c.bf16 %v383, %v380
      %v415 = vpack.c.bf16 %v391, %v388
      %v416 = vpack.c.bf16 %v399, %v396
      %v417 = vpack.c.bf16 %v407, %v404
      %v426 = vunpack.c.l.b16 %v410
      %v427 = vunpack.c.h.b16 %v410
      %v428 = vunpack.c.l.b16 %v411
      %v429 = vunpack.c.h.b16 %v411
      %v430 = vunpack.c.l.b16 %v412
      %v431 = vunpack.c.h.b16 %v412
      %v432 = vunpack.c.l.b16 %v413
      %v433 = vunpack.c.h.b16 %v413
      %v434 = vunpack.c.l.b16 %v414
      %v435 = vunpack.c.h.b16 %v414
      %v436 = vunpack.c.l.b16 %v415
      %v437 = vunpack.c.h.b16 %v415
      %v438 = vunpack.c.l.b16 %v416
      %v439 = vunpack.c.h.b16 %v416
      %v440 = vunpack.c.l.b16 %v417
      %v441 = vunpack.c.h.b16 %v417
      %v442 = vpack.c.b16 %v426, %v426
      %v443 = vpack.c.b16 %v427, %v427
      %v444 = vpack.c.b16 %v428, %v428
      %v445 = vpack.c.b16 %v429, %v429
      %v446 = vpack.c.b16 %v430, %v430
      %v447 = vpack.c.b16 %v431, %v431
      %v448 = vpack.c.b16 %v432, %v432
      %v449 = vpack.c.b16 %v433, %v433
      %v450 = vpack.c.b16 %v434, %v434
      %v451 = vpack.c.b16 %v435, %v435
      %v452 = vpack.c.b16 %v436, %v436
      %v453 = vpack.c.b16 %v437, %v437
      %v454 = vpack.c.b16 %v438, %v438
      %v455 = vpack.c.b16 %v439, %v439
      %v456 = vpack.c.b16 %v440, %v440
      %v457 = vpack.c.b16 %v441, %v441
      %474 = vst [vmem:[%s181] sm:$0xf] %v442
      %475 = vst [vmem:[%s181 + $0x4] sm:$0xf] %v443
      %476 = vst [vmem:[%s181 + $0x8] sm:$0xf] %v444
      %477 = vst [vmem:[%s181 + $0xc] sm:$0xf] %v445
      %478 = vst [vmem:[%s181 + $0x10] sm:$0xf] %v446
      %479 = vst [vmem:[%s181 + $0x14] sm:$0xf] %v447
      %480 = vst [vmem:[%s181 + $0x18] sm:$0xf] %v448
      %481 = vst [vmem:[%s181 + $0x1c] sm:$0xf] %v449
      %482 = vst [vmem:[%s181 + $0x20] sm:$0xf] %v450
      %483 = vst [vmem:[%s181 + $0x24] sm:$0xf] %v451
      %484 = vst [vmem:[%s181 + $0x28] sm:$0xf] %v452
      %485 = vst [vmem:[%s181 + $0x2c] sm:$0xf] %v453
      %486 = vst [vmem:[%s181 + $0x30] sm:$0xf] %v454
      %487 = vst [vmem:[%s181 + $0x34] sm:$0xf] %v455
      %488 = vst [vmem:[%s181 + $0x38] sm:$0xf] %v456
      %489 = vst [vmem:[%s181 + $0x3c] sm:$0xf] %v457
      %s490 = sadd.s32 %s18, %s17
      %s491 = smul.u32 16, %s490
      %p492 = scmp.lt.s32.totalorder %s491, 111
      %s493 = scalar_select %p492, %s491, 111
      %s494 = smul.addr %s493, 4
      %s495 = scalar_lea.vmem %s2, %s494
      // Predicated region
      $region29: #{forward.6} parent=27 // pred_check
        %p496 = pneg %p97
      $region30: #{forward.6} parent=27 // pred_check_branch
        %498 = sbr.rel (%p496) target = $region32
      $region31: #{forward.6} parent=27 // pred_region
        %s499 = sadd.s32 %s18, %s17
        %s500 = smul.u32 16, %s499
      $region32: #{forward.6} parent=27 // pred_fallthru
        _
    $region28: #{forward.6} parent=5 // pred_fallthru
      _
    %p501 = scmp.le.s32.totalorder 2, %s8
    // Predicated region
    $region33: #{forward.6} parent=5 // pred_check
      %p502 = pneg %p501
    $region34: #{forward.6} parent=5 // pred_check_branch
      %504 = sbr.rel (%p502) target = $region36
    $region35: #{forward.6} parent=5 // pred_region
      %s505 = ssub.s32 %s8, 2
      // Predicated region
      $region37: #{forward.6} parent=35 // pred_check
        %p506 = pneg %p103
      $region38: #{forward.6} parent=35 // pred_check_branch
        %508 = sbr.rel (%p506) target = $region40
      $region39: #{forward.6} parent=35 // pred_region
        %s509 = sadd.s32 %s20, %s19
        %s510 = smul.u32 16, %s509
        %p511 = scmp.lt.s32.totalorder %s510, 111
        %s512 = scalar_select %p511, %s510, 111
        %s513 = smul.addr %s512, 4
        %s514 = scalar_lea.vmem %s2, %s513
      $region40: #{forward.6} parent=35 // pred_fallthru
        _
    $region36: #{forward.6} parent=5 // pred_fallthru
      _
  $region6: #{forward.6} parent=0 // loop_footer
    %s12 = sadd.s32 1, %s8
  $region7: #{forward.6} parent=0 // loop_footer_branch
    %7 = sbr.rel target = $region3
  $region8: #{forward.6} parent=0 // loop_exit
    _

// kernel: forward.5
$region0: #{forward.5}
  #allocation0 [shape = 'u32[]', space=smem, size = 0x4, offset = 0x4, fixed_abs, tag = 'smem constant byte address 0x4 - core index']
  #allocation1 [shape = 'u32[144,128]{1,0:T(1,128)}', space=vmem, size = 0x12000, scoped, tag = 'internal scratch']
  #allocation2 [shape = 's32[1]{0}', space=sflag, size = 0x4, scoped, tag = 'scoped memory for forward.5']
  #allocation3 [shape = 'u8[1024]{0}', space=smem, size = 0x400, scoped, tag = 'prefetched SMEM operand 0']
  #allocation4 [shape = 'u8[1024]{0}', space=smem, size = 0x400, scoped, tag = 'prefetched SMEM operand 1']
  #allocation5 [shape = 'u8[512]{0}', space=smem, size = 0x200, scoped, tag = 'prefetched SMEM operand 2']
  %s0 = inlined_call_operand.vmem [shape: s32[2,7], index: 0, kind: input, shape index: {}]
  %s1 = inlined_call_operand.vmem [shape: s32[2,7], index: 1, kind: input, shape index: {}]
  %s2 = inlined_call_operand.vmem [shape: s32[2], index: 2, kind: input, shape index: {}]
  %s3 = inlined_call_operand.vmem [shape: bf16[7,64,128], index: 3, kind: input, shape index: {}]
  %s4 = inlined_call_operand.vmem [shape: bf16[896,128], index: 4, kind: input, shape index: {}]
  %s5 = inlined_call_operand.vmem [shape: f32[3,128], index: 5, kind: input, shape index: {}]
  %s6 = inlined_call_operand.vmem [shape: f32[128,128], index: 6, kind: output, shape index: {}]
  %s7 = sld [smem:[#allocation0]]
  $region57: #{forward.5} parent=0
    _
  %s9 = ssub.s32 1, %s7
  %s10 = scalar_select 0, %s9, %s7
  %s11 = sshll.u32 %s0, 4
  %s12 = int_to_ptr.vmem [resolvable:$true] %s11
  %14 = dma.vmem_to_smem %s12, 32, [#allocation3], [#allocation2]
  %s15 = sshll.u32 %s1, 4
  %s16 = int_to_ptr.vmem [resolvable:$true] %s15
  %18 = dma.vmem_to_smem %s16, 32, [#allocation4], [#allocation2]
  %s19 = sshll.u32 %s2, 4
  %s20 = int_to_ptr.vmem [resolvable:$true] %s19
  %22 = dma.vmem_to_smem %s20, 16, [#allocation5], [#allocation2]
  %23 = dma.done [#allocation2], 80
  %24 = sfence
  loop: start=0, step=1, limit=16
  $region2: #{forward.5} parent=0 // loop_pre_header
    _
  $region3: #{forward.5} parent=0 // loop_header
    %s26 = sphi 0, %s30
    %p27 = scmp.ge.s32.totalorder %s26, 16
    %s33 = sphi 0, %s45
    %s34 = sphi 0, %s41
    %s35 = sphi 0, %s33
    %s36 = sphi 0, %s34
    %s37 = sphi 0, %s35
    %s38 = sphi 0, %s36
    %s64 = sphi 0, %s66
    %s67 = sphi 0, %s64
    %s68 = sphi 0, %s67
    %s84 = sphi 0, %s68
    %s88 = sphi 0, %s88
    %s90 = sphi 0, %s88
    %s91 = sphi 0, %s90
    %s105 = sphi 0, %s91
    %s109 = sphi 0, %s109
    %s111 = sphi 0, %s109
    %s112 = sphi 0, %s111
    %s126 = sphi 0, %s112
    %s132 = sphi 0, %s134
    %s135 = sphi 0, %s132
    %s136 = sphi 0, %s135
    %s152 = sphi 0, %s136
  $region4: #{forward.5} parent=0 // loop_header_branch
    %29 = sbr.rel (%p27) target = $region8
  $region5: #{forward.5} parent=0 // loop_body
    %s31 = ssub.s32 %s26, 1
    %s32 = ssub.s32 %s26, 2
    %s39 = sadd.s32 1, %s34
    %p40 = scmp.ge.s32.totalorder %s39, 7
    %s41 = scalar_select %p40, 0, %s39
    %s42 = sadd.s32 1, %s33
    %s43 = scalar_select %p40, %s42, %s33
    %p44 = scmp.ge.s32.totalorder %s43, 2
    %s45 = scalar_select %p44, 0, %s43
    %s46 = sshra.s32 %s34, 7
    %s47 = sand.u32 %s34, 127
    %s48 = sadd.s32 %s46, %s33
    %s49 = smul.u32 %s48, 128
    %s50 = sshra.s32 %s34, 7
    %s51 = sand.u32 %s34, 127
    %s52 = sadd.s32 %s49, %s51
    %s53 = sld [smem:[#allocation3 + %s52]]
    %s54 = sshra.s32 %s41, 7
    %s55 = sand.u32 %s41, 127
    %s56 = sadd.s32 %s54, %s45
    %s57 = smul.u32 %s56, 128
    %s58 = sshra.s32 %s41, 7
    %s59 = sand.u32 %s41, 127
    %s60 = sadd.s32 %s57, %s59
    %s61 = sld [smem:[#allocation3 + %s60]]
    %s62 = ssub.s32 %s53, %s61
    %p63 = scmp.eq.s32.totalorder %s62, 0
    %s65 = sadd.s32 %s64, 1
    %s66 = scalar_select %p63, %s64, %s65
    %p69 = pneg %p63
    %p70 = scmp.eq.s32.totalorder %s26, 13
    %p71 = por %p69, %p70
    %p72 = scmp.ne.s32.totalorder %s64, %s67
    %p73 = scmp.eq.s32.totalorder %s26, 0
    %p74 = por %p72, %p73
    %p75 = scmp.ne.s32.totalorder %s64, %s67
    %p76 = scmp.eq.s32.totalorder %s31, 13
    %p77 = por %p75, %p76
    %p78 = scmp.ne.s32.totalorder %s67, %s68
    %p79 = scmp.eq.s32.totalorder %s31, 0
    %p80 = por %p78, %p79
    %p81 = scmp.ne.s32.totalorder %s67, %s68
    %p82 = scmp.eq.s32.totalorder %s32, 13
    %p83 = por %p81, %p82
    %p85 = scmp.ne.s32.totalorder %s68, %s84
    %p86 = scmp.eq.s32.totalorder %s32, 0
    %p87 = por %p85, %p86
    %s89 = sadd.s32 %s88, 1
    %p92 = scmp.eq.s32.totalorder %s26, 13
    %p93 = scmp.ne.s32.totalorder %s88, %s90
    %p94 = scmp.eq.s32.totalorder %s26, 0
    %p95 = por %p93, %p94
    %p96 = scmp.ne.s32.totalorder %s88, %s90
    %p97 = scmp.eq.s32.totalorder %s31, 13
    %p98 = por %p96, %p97
    %p99 = scmp.ne.s32.totalorder %s90, %s91
    %p100 = scmp.eq.s32.totalorder %s31, 0
    %p101 = por %p99, %p100
    %p102 = scmp.ne.s32.totalorder %s90, %s91
    %p103 = scmp.eq.s32.totalorder %s32, 13
    %p104 = por %p102, %p103
    %p106 = scmp.ne.s32.totalorder %s91, %s105
    %p107 = scmp.eq.s32.totalorder %s32, 0
    %p108 = por %p106, %p107
    %s110 = sadd.s32 %s109, 1
    %p113 = scmp.eq.s32.totalorder %s26, 13
    %p114 = scmp.ne.s32.totalorder %s109, %s111
    %p115 = scmp.eq.s32.totalorder %s26, 0
    %p116 = por %p114, %p115
    %p117 = scmp.ne.s32.totalorder %s109, %s111
    %p118 = scmp.eq.s32.totalorder %s31, 13
    %p119 = por %p117, %p118
    %p120 = scmp.ne.s32.totalorder %s111, %s112
    %p121 = scmp.eq.s32.totalorder %s31, 0
    %p122 = por %p120, %p121
    %p123 = scmp.ne.s32.totalorder %s111, %s112
    %p124 = scmp.eq.s32.totalorder %s32, 13
    %p125 = por %p123, %p124
    %p127 = scmp.ne.s32.totalorder %s112, %s126
    %p128 = scmp.eq.s32.totalorder %s32, 0
    %p129 = por %p127, %p128
    %s130 = ssub.s32 %s33, %s45
    %p131 = scmp.eq.s32.totalorder %s130, 0
    %s133 = sadd.s32 %s132, 1
    %s134 = scalar_select %p131, %s132, %s133
    %p137 = pneg %p131
    %p138 = scmp.eq.s32.totalorder %s26, 13
    %p139 = por %p137, %p138
    %p140 = scmp.ne.s32.totalorder %s132, %s135
    %p141 = scmp.eq.s32.totalorder %s26, 0
    %p142 = por %p140, %p141
    %p143 = scmp.ne.s32.totalorder %s132, %s135
    %p144 = scmp.eq.s32.totalorder %s31, 13
    %p145 = por %p143, %p144
    %p146 = scmp.ne.s32.totalorder %s135, %s136
    %p147 = scmp.eq.s32.totalorder %s31, 0
    %p148 = por %p146, %p147
    %p149 = scmp.ne.s32.totalorder %s135, %s136
    %p150 = scmp.eq.s32.totalorder %s32, 13
    %p151 = por %p149, %p150
    %p153 = scmp.ne.s32.totalorder %s136, %s152
    %p154 = scmp.eq.s32.totalorder %s32, 0
    %p155 = por %p153, %p154
    %p156 = scmp.le.s32.totalorder 1, %s26
    %p157 = scmp.lt.s32.totalorder %s26, 15
    %p158 = pnand %p156, %p157
    %p159 = pneg %p158
    // Predicated region
    $region9: #{forward.5} parent=5 // pred_check
      _
    $region10: #{forward.5} parent=5 // pred_check_branch
      %161 = sbr.rel (%p158) target = $region12
    $region11: #{forward.5} parent=5 // pred_region
      %s162 = ssub.s32 %s26, 1
      // Predicated region
      $region13: #{forward.5} parent=11 // pred_check
        %p163 = pneg %p101
      $region14: #{forward.5} parent=11 // pred_check_branch
        %165 = sbr.rel (%p163) target = $region16
      $region15: #{forward.5} parent=11 // pred_region
        _
      $region16: #{forward.5} parent=11 // pred_fallthru
        _
      // Predicated region
      $region17: #{forward.5} parent=11 // pred_check
        %p166 = pneg %p122
      $region18: #{forward.5} parent=11 // pred_check_branch
        %168 = sbr.rel (%p166) target = $region20
      $region19: #{forward.5} parent=11 // pred_region
        _
      $region20: #{forward.5} parent=11 // pred_fallthru
        _
    $region12: #{forward.5} parent=5 // pred_fallthru
      _
    %p169 = scmp.lt.s32.totalorder %s26, 14
    // Predicated region
    $region21: #{forward.5} parent=5 // pred_check
      %p170 = pneg %p169
    $region22: #{forward.5} parent=5 // pred_check_branch
      %172 = sbr.rel (%p170) target = $region24
    $region23: #{forward.5} parent=5 // pred_region
      // Predicated region
      $region25: #{forward.5} parent=23 // pred_check
        %p173 = pneg %p74
      $region26: #{forward.5} parent=23 // pred_check_branch
        %175 = sbr.rel (%p173) target = $region28
      $region27: #{forward.5} parent=23 // pred_region
        %s176 = sshra.s32 %s34, 7
        %s177 = sand.u32 %s34, 127
        %s178 = sadd.s32 %s176, %s33
        %s179 = smul.u32 %s178, 128
        %s180 = sshra.s32 %s34, 7
        %s181 = sand.u32 %s34, 127
        %s182 = sadd.s32 %s179, %s181
        %s183 = sld [smem:[#allocation3 + %s182]]
        %p184 = scmp.lt.s32.totalorder %s183, 6
        %s185 = scalar_select %p184, %s183, 6
        %s186 = smul.addr %s185, 8
        %s187 = smul.addr %s186, 4
        %s188 = scalar_lea.vmem %s3, %s187
        %s189 = sshra.s32 %s34, 7
        %s190 = sand.u32 %s34, 127
        %s191 = sadd.s32 %s189, %s33
        %s192 = smul.u32 %s191, 128
        %s193 = sshra.s32 %s34, 7
        %s194 = sand.u32 %s34, 127
        %s195 = sadd.s32 %s192, %s194
        %s196 = sld [smem:[#allocation3 + %s195]]
      $region28: #{forward.5} parent=23 // pred_fallthru
        _
    $region24: #{forward.5} parent=5 // pred_fallthru
      _
    %p197 = scmp.le.s32.totalorder 1, %s26
    %p198 = scmp.lt.s32.totalorder %s26, 15
    %p199 = pnand %p197, %p198
    %p200 = pneg %p199
    // Predicated region
    $region29: #{forward.5} parent=5 // pred_check
      _
    $region30: #{forward.5} parent=5 // pred_check_branch
      %202 = sbr.rel (%p199) target = $region32
    $region31: #{forward.5} parent=5 // pred_region
      %s203 = ssub.s32 %s26, 1
      %s204 = sshra.s32 %s36, 7
      %s205 = sand.u32 %s36, 127
      %s206 = sadd.s32 %s204, %s35
      %s207 = smul.u32 %s206, 128
      %s208 = sshra.s32 %s36, 7
      %s209 = sand.u32 %s36, 127
      %s210 = sadd.s32 %s207, %s209
      %s211 = sld [smem:[#allocation3 + %s210]]
      %p212 = scmp.lt.s32.totalorder %s211, 6
      %s213 = scalar_select %p212, %s211, 6
      %s214 = smul.addr %s213, 8
      %s215 = smul.addr %s214, 4
      %s216 = scalar_lea.vmem %s3, %s215
      %p217 = pneg %p80
      %p218 = pneg %p77
      %p219 = pneg %p101
      %p220 = pneg %p98
      %p221 = pneg %p122
      %p222 = pneg %p119
      %p223 = pneg %p148
      %p224 = pneg %p145
      %s225 = smul.u32 8, %s35
      %p226 = scmp.lt.s32.totalorder %s225, 15
      %s227 = scalar_select %p226, %s225, 15
      %s228 = smul.addr %s227, 8
      %s229 = scalar_lea.vmem %s6, %s228
      %s230 = sshra.s32 %s36, 7
      %s231 = sand.u32 %s36, 127
      %s232 = sadd.s32 %s230, %s35
      %s233 = smul.u32 %s232, 128
      %s234 = sshra.s32 %s36, 7
      %s235 = sand.u32 %s36, 127
      %s236 = sadd.s32 %s233, %s235
      %s237 = sld [smem:[#allocation3 + %s236]]
      %p238 = scmp.lt.s32.totalorder %s237, 6
      %s239 = scalar_select %p238, %s237, 6
      %s240 = smul.addr %s239, 8
      %s241 = smul.addr %s240, 4
      %s242 = scalar_lea.vmem %s3, %s241
      %s243 = sshra.s32 %s36, 7
      %s244 = sand.u32 %s36, 127
      %s245 = sadd.s32 %s243, %s35
      %s246 = smul.u32 %s245, 128
      %s247 = sshra.s32 %s36, 7
      %s248 = sand.u32 %s36, 127
      %s249 = sadd.s32 %s246, %s248
      %s250 = sld [smem:[#allocation3 + %s249]]
      %s251 = smul.u32 8, %s35
      %p252 = scmp.lt.s32.totalorder %s251, 15
      %s253 = scalar_select %p252, %s251, 15
      %s254 = smul.addr %s253, 8
      %s255 = scalar_lea.vmem %s6, %s254
      %s256 = smul.u32 8, %s35
      %p258 = scmp.eq.s32.totalorder %s36, 0
      // Predicated region
      $region33: #{forward.5} parent=31 // pred_check
        %p259 = pneg %p258
      $region34: #{forward.5} parent=31 // pred_check_branch
        %261 = sbr.rel (%p259) target = $region36
      $region35: #{forward.5} parent=31 // pred_region
        %262 = vst [vmem:[%s255] sm:$0xff] 0.0
        %263 = vst [vmem:[%s255 + $0x8] sm:$0xff] 0.0
        %264 = vst [vmem:[%s255 + $0x10] sm:$0xff] 0.0
        %265 = vst [vmem:[%s255 + $0x18] sm:$0xff] 0.0
        %266 = vst [vmem:[%s255 + $0x20] sm:$0xff] 0.0
        %267 = vst [vmem:[%s255 + $0x28] sm:$0xff] 0.0
        %268 = vst [vmem:[%s255 + $0x30] sm:$0xff] 0.0
        %269 = vst [vmem:[%s255 + $0x38] sm:$0xff] 0.0
      $region36: #{forward.5} parent=31 // pred_fallthru
        _
      %s270 = sld [smem:[#allocation5 + %s35]]
      %p271 = scmp.lt.s32.totalorder %s36, %s270
      // Predicated region
      $region37: #{forward.5} parent=31 // pred_check
        %p272 = pneg %p271
      $region38: #{forward.5} parent=31 // pred_check_branch
        %274 = sbr.rel (%p272) target = $region40
      $region39: #{forward.5} parent=31 // pred_region
        %s275 = sshra.s32 %s36, 7
        %s276 = sand.u32 %s36, 127
        %s277 = sadd.s32 %s275, %s35
        %s278 = smul.u32 %s277, 128
        %s279 = sshra.s32 %s36, 7
        %s280 = sand.u32 %s36, 127
        %s281 = sadd.s32 %s278, %s280
        %s282 = sld [smem:[#allocation4 + %s281]]
        %s283 = smul.u32 %s282, 128
        %s284 = sshra.s32 %s283, 3
        %s285 = sand.u32 %s283, 7
        %s286 = smul.addr %s284, 4
        %s287 = scalar_lea.vmem %s4, %s286
        %v288 = vld [vmem:[%s287] sm:$0xf]
        %v289 = vld [vmem:[%s287 + $0x4] sm:$0xf]
        %v290 = vld [vmem:[%s287 + $0x8] sm:$0xf]
        %v291 = vld [vmem:[%s287 + $0xc] sm:$0xf]
        %v292 = vld [vmem:[%s287 + $0x10] sm:$0xf]
        %v293 = vld [vmem:[%s287 + $0x14] sm:$0xf]
        %v294 = vld [vmem:[%s287 + $0x18] sm:$0xf]
        %v295 = vld [vmem:[%s287 + $0x1c] sm:$0xf]
        %v296 = vld [vmem:[%s287 + $0x20] sm:$0xf]
        %v297 = vld [vmem:[%s287 + $0x24] sm:$0xf]
        %v298 = vld [vmem:[%s287 + $0x28] sm:$0xf]
        %v299 = vld [vmem:[%s287 + $0x2c] sm:$0xf]
        %v300 = vld [vmem:[%s287 + $0x30] sm:$0xf]
        %v301 = vld [vmem:[%s287 + $0x34] sm:$0xf]
        %v302 = vld [vmem:[%s287 + $0x38] sm:$0xf]
        %v303 = vld [vmem:[%s287 + $0x3c] sm:$0xf]
        %v304 = vld [vmem:[%s255] sm:$0xff]
        %v305 = vld [vmem:[%s255 + $0x8] sm:$0xff]
        %v306 = vld [vmem:[%s255 + $0x10] sm:$0xff]
        %v307 = vld [vmem:[%s255 + $0x18] sm:$0xff]
        %v308 = vld [vmem:[%s255 + $0x20] sm:$0xff]
        %v309 = vld [vmem:[%s255 + $0x28] sm:$0xff]
        %v310 = vld [vmem:[%s255 + $0x30] sm:$0xff]
        %v311 = vld [vmem:[%s255 + $0x38] sm:$0xff]
        %v312 = vld [vmem:[%s242] sm:$0xf]
        %v313 = vld [vmem:[%s242 + $0x4] sm:$0xf]
        %v314 = vld [vmem:[%s242 + $0x8] sm:$0xf]
        %v315 = vld [vmem:[%s242 + $0xc] sm:$0xf]
        %v316 = vld [vmem:[%s242 + $0x10] sm:$0xf]
        %v317 = vld [vmem:[%s242 + $0x14] sm:$0xf]
        %v318 = vld [vmem:[%s242 + $0x18] sm:$0xf]
        %v319 = vld [vmem:[%s242 + $0x1c] sm:$0xf]
        %v328 = vunpack.c.l.b16 %v312
        %v329 = vunpack.c.l.b16 %v313
        %v330 = vunpack.c.l.b16 %v314
        %v331 = vunpack.c.l.b16 %v315
        %v332 = vunpack.c.l.b16 %v316
        %v333 = vunpack.c.l.b16 %v317
        %v334 = vunpack.c.l.b16 %v318
        %v335 = vunpack.c.l.b16 %v319
        %v336 = vpack.c.b16 %v329, %v328
        %v337 = vpack.c.b16 %v331, %v330
        %v338 = vpack.c.b16 %v333, %v332
        %v339 = vpack.c.b16 %v335, %v334
        %v360 = vunpack.c.l.b16 %v288
        %v361 = vunpack.c.l.b16 %v289
        %v362 = vunpack.c.l.b16 %v290
        %v363 = vunpack.c.l.b16 %v291
        %v364 = vunpack.c.l.b16 %v292
        %v365 = vunpack.c.l.b16 %v293
        %v366 = vunpack.c.l.b16 %v294
        %v367 = vunpack.c.l.b16 %v295
        %v368 = vunpack.c.l.b16 %v296
        %v369 = vunpack.c.l.b16 %v297
        %v370 = vunpack.c.l.b16 %v298
        %v371 = vunpack.c.l.b16 %v299
        %v372 = vunpack.c.l.b16 %v300
        %v373 = vunpack.c.l.b16 %v301
        %v374 = vunpack.c.l.b16 %v302
        %v375 = vunpack.c.l.b16 %v303
        %v376 = vpack.c.b16 %v361, %v360
        %v377 = vpack.c.b16 %v363, %v362
        %v378 = vpack.c.b16 %v365, %v364
        %v379 = vpack.c.b16 %v367, %v366
        %v380 = vpack.c.b16 %v369, %v368
        %v381 = vpack.c.b16 %v371, %v370
        %v382 = vpack.c.b16 %v373, %v372
        %v383 = vpack.c.b16 %v375, %v374
        %392 = vmatprep.subr.bf16.mxu0 0
        %393 = vmatpush1.bf16.msra.mxu0 %v376
        %394 = vmatprep.subr.bf16.mxu0 0
        %395 = vmatpush1.bf16.msra.mxu0 %v377
        %396 = vmatprep.subr.bf16.mxu0 0
        %397 = vmatpush1.bf16.msra.mxu0 %v378
        %398 = vmatprep.subr.bf16.mxu0 0
        %399 = vmatpush1.bf16.msra.mxu0 %v379
        %400 = vmatprep.subr.bf16.mxu0 0
        %401 = vmatpush1.bf16.msra.mxu0 %v380
        %402 = vmatprep.subr.bf16.mxu0 0
        %403 = vmatpush1.bf16.msra.mxu0 %v381
        %404 = vmatprep.subr.bf16.mxu0 0
        %405 = vmatpush1.bf16.msra.mxu0 %v382
        %406 = vmatprep.subr.bf16.mxu0 0
        %407 = vmatpush1.bf16.msra.mxu0 %v383
        %408 = vmatprep.subr.bf16.mxu0 0
        %409 = vmatpush1.bf16.msra.mxu0 0
        %410 = vmatprep.subr.bf16.mxu0 0
        %411 = vmatpush1.bf16.msra.mxu0 0
        %412 = vmatprep.subr.bf16.mxu0 0
        %413 = vmatpush1.bf16.msra.mxu0 0
        %414 = vmatprep.subr.bf16.mxu0 0
        %415 = vmatpush1.bf16.msra.mxu0 0
        %416 = vmatprep.subr.bf16.mxu0 0
        %417 = vmatpush1.bf16.msra.mxu0 0
        %418 = vmatprep.subr.bf16.mxu0 0
        %419 = vmatpush1.bf16.msra.mxu0 0
        %420 = vmatprep.subr.bf16.mxu0 0
        %421 = vmatpush1.bf16.msra.mxu0 0
        %422 = vmatprep.subr.bf16.mxu0 0
        %423 = vmatpush1.bf16.msra.mxu0 0
        %424 = vmatprep.mubr.bf16.mxu0 0
        %425 = vmatmul.mubr.bf16.gmra.mrb[0].mxu0 %v336
        %v426 = vpop.f32.mrb[0].mxu0
        %v427 = vadd.f32 0.0, %v426
        %v428 = vpop.f32.mrb[0].mxu0
        %v429 = vpop.f32.mrb[0].mxu0
        %v430 = vadd.f32 0.0, %v429
        %v431 = vpop.f32.mrb[0].mxu0
        %432 = vmatprep.mubr.bf16.mxu0 0
        %433 = vmatmul.mubr.bf16.gmra.mrb[0].mxu0 %v337
        %v434 = vpop.f32.mrb[0].mxu0
        %v435 = vadd.f32 0.0, %v434
        %v436 = vpop.f32.mrb[0].mxu0
        %v437 = vpop.f32.mrb[0].mxu0
        %v438 = vadd.f32 0.0, %v437
        %v439 = vpop.f32.mrb[0].mxu0
        %440 = vmatprep.mubr.bf16.mxu0 0
        %441 = vmatmul.mubr.bf16.gmra.mrb[0].mxu0 %v338
        %v442 = vpop.f32.mrb[0].mxu0
        %v443 = vadd.f32 0.0, %v442
        %v444 = vpop.f32.mrb[0].mxu0
        %v445 = vpop.f32.mrb[0].mxu0
        %v446 = vadd.f32 0.0, %v445
        %v447 = vpop.f32.mrb[0].mxu0
        %448 = vmatprep.mubr.bf16.mxu0 0
        %449 = vmatmul.mubr.bf16.gmra.mrb[0].mxu0 %v339
        %v450 = vpop.f32.mrb[0].mxu0
        %v451 = vadd.f32 0.0, %v450
        %v452 = vpop.f32.mrb[0].mxu0
        %v453 = vpop.f32.mrb[0].mxu0
        %v454 = vadd.f32 0.0, %v453
        %v455 = vpop.f32.mrb[0].mxu0
        %456 = vdwg.mxu0
        %v457 = vadd.f32 %v304, %v427
        %v458 = vadd.f32 %v305, %v430
        %v459 = vadd.f32 %v306, %v435
        %v460 = vadd.f32 %v307, %v438
        %v461 = vadd.f32 %v308, %v443
        %v462 = vadd.f32 %v309, %v446
        %v463 = vadd.f32 %v310, %v451
        %v464 = vadd.f32 %v311, %v454
        %465 = vst [vmem:[%s255] sm:$0xff] %v457
        %466 = vst [vmem:[%s255 + $0x8] sm:$0xff] %v458
        %467 = vst [vmem:[%s255 + $0x10] sm:$0xff] %v459
        %468 = vst [vmem:[%s255 + $0x18] sm:$0xff] %v460
        %469 = vst [vmem:[%s255 + $0x20] sm:$0xff] %v461
        %470 = vst [vmem:[%s255 + $0x28] sm:$0xff] %v462
        %471 = vst [vmem:[%s255 + $0x30] sm:$0xff] %v463
        %472 = vst [vmem:[%s255 + $0x38] sm:$0xff] %v464
      $region40: #{forward.5} parent=31 // pred_fallthru
        _
      %p473 = scmp.eq.s32.totalorder %s36, 6
      // Predicated region
      $region41: #{forward.5} parent=31 // pred_check
        %p474 = pneg %p473
      $region42: #{forward.5} parent=31 // pred_check_branch
        %476 = sbr.rel (%p474) target = $region44
      $region43: #{forward.5} parent=31 // pred_region
        %v477 = vld [vmem:[%s255] sm:$0xff]
        %v478 = vld [vmem:[%s255 + $0x8] sm:$0xff]
        %v479 = vld [vmem:[%s255 + $0x10] sm:$0xff]
        %v480 = vld [vmem:[%s255 + $0x18] sm:$0xff]
        %v481 = vld [vmem:[%s255 + $0x20] sm:$0xff]
        %v482 = vld [vmem:[%s255 + $0x28] sm:$0xff]
        %v483 = vld [vmem:[%s255 + $0x30] sm:$0xff]
        %v484 = vld [vmem:[%s255 + $0x38] sm:$0xff]
        %v485 = vld [vmem:[%s5] sm:$0x1]
        %v486 = vlaneseq
        %v487 = vshrl.u32 %v486, 7
        %v488 = vsub.s32 0, %v487
        %v489 = vrot.slane %v485, %v488
        %v490 = vadd.f32 %v477, %v489
        %v491 = vadd.f32 %v478, %v489
        %v492 = vadd.f32 %v479, %v489
        %v493 = vadd.f32 %v480, %v489
        %v494 = vadd.f32 %v481, %v489
        %v495 = vadd.f32 %v482, %v489
        %v496 = vadd.f32 %v483, %v489
        %v497 = vadd.f32 %v484, %v489
        %v498 = vlaneseq
        %v499 = vand.u32 %v498, 127
        %vm500 = vcmp.lt.s32.totalorder %v499, 32
        %v501 = vsel %vm500, %v490, 0.0
        %v502 = vsel %vm500, %v491, 0.0
        %v503 = vsel %vm500, %v492, 0.0
        %v504 = vsel %vm500, %v493, 0.0
        %v505 = vsel %vm500, %v494, 0.0
        %v506 = vsel %vm500, %v495, 0.0
        %v507 = vsel %vm500, %v496, 0.0
        %v508 = vsel %vm500, %v497, 0.0
        %509 = vadd.xlane.f32.xlu0 %v501
        %v510 = vpop.xlane.xlu0 %509
        %511 = vadd.xlane.f32.xlu0 %v502
        %v512 = vpop.xlane.xlu0 %511
        %513 = vadd.xlane.f32.xlu0 %v503
        %v514 = vpop.xlane.xlu0 %513
        %515 = vadd.xlane.f32.xlu0 %v504
        %v516 = vpop.xlane.xlu0 %515
        %517 = vadd.xlane.f32.xlu0 %v505
        %v518 = vpop.xlane.xlu0 %517
        %519 = vadd.xlane.f32.xlu0 %v506
        %v520 = vpop.xlane.xlu0 %519
        %521 = vadd.xlane.f32.xlu0 %v507
        %v522 = vpop.xlane.xlu0 %521
        %523 = vadd.xlane.f32.xlu0 %v508
        %v524 = vpop.xlane.xlu0 %523
        %v525 = vmul.f32 %v510, 0.03125
        %v526 = vmul.f32 %v512, 0.03125
        %v527 = vmul.f32 %v514, 0.03125
        %v528 = vmul.f32 %v516, 0.03125
        %v529 = vmul.f32 %v518, 0.03125
        %v530 = vmul.f32 %v520, 0.03125
        %v531 = vmul.f32 %v522, 0.03125
        %v532 = vmul.f32 %v524, 0.03125
        %v533 = vsub.f32 %v490, %v525
        %v534 = vsub.f32 %v491, %v526
        %v535 = vsub.f32 %v492, %v527
        %v536 = vsub.f32 %v493, %v528
        %v537 = vsub.f32 %v494, %v529
        %v538 = vsub.f32 %v495, %v530
        %v539 = vsub.f32 %v496, %v531
        %v540 = vsub.f32 %v497, %v532
        %v541 = vsel %vm500, %v533, 0.0
        %v542 = vsel %vm500, %v534, 0.0
        %v543 = vsel %vm500, %v535, 0.0
        %v544 = vsel %vm500, %v536, 0.0
        %v545 = vsel %vm500, %v537, 0.0
        %v546 = vsel %vm500, %v538, 0.0
        %v547 = vsel %vm500, %v539, 0.0
        %v548 = vsel %vm500, %v540, 0.0
        %v549 = vmul.f32 %v541, %v541
        %v550 = vmul.f32 %v542, %v542
        %v551 = vmul.f32 %v543, %v543
        %v552 = vmul.f32 %v544, %v544
        %v553 = vmul.f32 %v545, %v545
        %v554 = vmul.f32 %v546, %v546
        %v555 = vmul.f32 %v547, %v547
        %v556 = vmul.f32 %v548, %v548
        %557 = vadd.xlane.f32.xlu0 %v549
        %v558 = vpop.xlane.xlu0 %557
        %559 = vadd.xlane.f32.xlu0 %v550
        %v560 = vpop.xlane.xlu0 %559
        %561 = vadd.xlane.f32.xlu0 %v551
        %v562 = vpop.xlane.xlu0 %561
        %563 = vadd.xlane.f32.xlu0 %v552
        %v564 = vpop.xlane.xlu0 %563
        %565 = vadd.xlane.f32.xlu0 %v553
        %v566 = vpop.xlane.xlu0 %565
        %567 = vadd.xlane.f32.xlu0 %v554
        %v568 = vpop.xlane.xlu0 %567
        %569 = vadd.xlane.f32.xlu0 %v555
        %v570 = vpop.xlane.xlu0 %569
        %571 = vadd.xlane.f32.xlu0 %v556
        %v572 = vpop.xlane.xlu0 %571
        %v573 = vmul.f32 %v558, 0.03125
        %v574 = vmul.f32 %v560, 0.03125
        %v575 = vmul.f32 %v562, 0.03125
        %v576 = vmul.f32 %v564, 0.03125
        %v577 = vmul.f32 %v566, 0.03125
        %v578 = vmul.f32 %v568, 0.03125
        %v579 = vmul.f32 %v570, 0.03125
        %v580 = vmul.f32 %v572, 0.03125
        %v581 = vadd.f32 %v573, 1e-05
        %v582 = vadd.f32 %v574, 1e-05
        %v583 = vadd.f32 %v575, 1e-05
        %v584 = vadd.f32 %v576, 1e-05
        %v585 = vadd.f32 %v577, 1e-05
        %v586 = vadd.f32 %v578, 1e-05
        %v587 = vadd.f32 %v579, 1e-05
        %v588 = vadd.f32 %v580, 1e-05
        %v589 = vrsqrt.pop %v581
        %v590 = vrsqrt.pop %v582
        %v591 = vrsqrt.pop %v583
        %v592 = vrsqrt.pop %v584
        %v593 = vrsqrt.pop %v585
        %v594 = vrsqrt.pop %v586
        %v595 = vrsqrt.pop %v587
        %v596 = vrsqrt.pop %v588
        %v597 = vmul.f32 %v541, %v589
        %v598 = vmul.f32 %v542, %v590
        %v599 = vmul.f32 %v543, %v591
        %v600 = vmul.f32 %v544, %v592
        %v601 = vmul.f32 %v545, %v593
        %v602 = vmul.f32 %v546, %v594
        %v603 = vmul.f32 %v547, %v595
        %v604 = vmul.f32 %v548, %v596
        %v605 = vld [vmem:[%s5 + $0x1] sm:$0x1]
        %v606 = vlaneseq
        %v607 = vshrl.u32 %v606, 7
        %v608 = vsub.s32 0, %v607
        %v609 = vrot.slane %v605, %v608
        %v610 = vmul.f32 %v597, %v609
        %v611 = vmul.f32 %v598, %v609
        %v612 = vmul.f32 %v599, %v609
        %v613 = vmul.f32 %v600, %v609
        %v614 = vmul.f32 %v601, %v609
        %v615 = vmul.f32 %v602, %v609
        %v616 = vmul.f32 %v603, %v609
        %v617 = vmul.f32 %v604, %v609
        %v618 = vld [vmem:[%s5 + $0x2] sm:$0x1]
        %v619 = vlaneseq
        %v620 = vshrl.u32 %v619, 7
        %v621 = vsub.s32 0, %v620
        %v622 = vrot.slane %v618, %v621
        %v623 = vadd.f32 %v610, %v622
        %v624 = vadd.f32 %v611, %v622
        %v625 = vadd.f32 %v612, %v622
        %v626 = vadd.f32 %v613, %v622
        %v627 = vadd.f32 %v614, %v622
        %v628 = vadd.f32 %v615, %v622
        %v629 = vadd.f32 %v616, %v622
        %v630 = vadd.f32 %v617, %v622
        %v631 = vmax.f32 %v623, 0.0
        %v632 = vmax.f32 %v624, 0.0
        %v633 = vmax.f32 %v625, 0.0
        %v634 = vmax.f32 %v626, 0.0
        %v635 = vmax.f32 %v627, 0.0
        %v636 = vmax.f32 %v628, 0.0
        %v637 = vmax.f32 %v629, 0.0
        %v638 = vmax.f32 %v630, 0.0
        %v639 = vsel %vm500, %v631, 0.0
        %v640 = vsel %vm500, %v632, 0.0
        %v641 = vsel %vm500, %v633, 0.0
        %v642 = vsel %vm500, %v634, 0.0
        %v643 = vsel %vm500, %v635, 0.0
        %v644 = vsel %vm500, %v636, 0.0
        %v645 = vsel %vm500, %v637, 0.0
        %v646 = vsel %vm500, %v638, 0.0
        %647 = vst [vmem:[%s255] sm:$0xff] %v639
        %648 = vst [vmem:[%s255 + $0x8] sm:$0xff] %v640
        %649 = vst [vmem:[%s255 + $0x10] sm:$0xff] %v641
        %650 = vst [vmem:[%s255 + $0x18] sm:$0xff] %v642
        %651 = vst [vmem:[%s255 + $0x20] sm:$0xff] %v643
        %652 = vst [vmem:[%s255 + $0x28] sm:$0xff] %v644
        %653 = vst [vmem:[%s255 + $0x30] sm:$0xff] %v645
        %654 = vst [vmem:[%s255 + $0x38] sm:$0xff] %v646
      $region44: #{forward.5} parent=31 // pred_fallthru
        _
      %s655 = smul.u32 8, %s35
      %p656 = scmp.lt.s32.totalorder %s655, 15
      %s657 = scalar_select %p656, %s655, 15
      %s658 = smul.addr %s657, 8
      %s659 = scalar_lea.vmem %s6, %s658
      // Predicated region
      $region45: #{forward.5} parent=31 // pred_check
        %p660 = pneg %p145
      $region46: #{forward.5} parent=31 // pred_check_branch
        %662 = sbr.rel (%p660) target = $region48
      $region47: #{forward.5} parent=31 // pred_region
        %s663 = smul.u32 8, %s35
      $region48: #{forward.5} parent=31 // pred_fallthru
        _
    $region32: #{forward.5} parent=5 // pred_fallthru
      _
    %p664 = scmp.le.s32.totalorder 2, %s26
    // Predicated region
    $region49: #{forward.5} parent=5 // pred_check
      %p665 = pneg %p664
    $region50: #{forward.5} parent=5 // pred_check_branch
      %667 = sbr.rel (%p665) target = $region52
    $region51: #{forward.5} parent=5 // pred_region
      %s668 = ssub.s32 %s26, 2
      // Predicated region
      $region53: #{forward.5} parent=51 // pred_check
        %p669 = pneg %p151
      $region54: #{forward.5} parent=51 // pred_check_branch
        %671 = sbr.rel (%p669) target = $region56
      $region55: #{forward.5} parent=51 // pred_region
        %s672 = smul.u32 8, %s37
        %p673 = scmp.lt.s32.totalorder %s672, 15
        %s674 = scalar_select %p673, %s672, 15
        %s675 = smul.addr %s674, 8
        %s676 = scalar_lea.vmem %s6, %s675
      $region56: #{forward.5} parent=51 // pred_fallthru
        _
    $region52: #{forward.5} parent=5 // pred_fallthru
      _
  $region6: #{forward.5} parent=0 // loop_footer
    %s30 = sadd.s32 1, %s26
  $region7: #{forward.5} parent=0 // loop_footer_branch
    %25 = sbr.rel target = $region3
  $region8: #{forward.5} parent=0 // loop_exit
    _

// kernel: forward.7
$region0: #{forward.7}
  #allocation0 [shape = 'u32[]', space=smem, size = 0x4, offset = 0x4, fixed_abs, tag = 'smem constant byte address 0x4 - core index']
  #allocation1 [shape = 'u32[144,128]{1,0:T(1,128)}', space=vmem, size = 0x12000, scoped, tag = 'internal scratch']
  #allocation2 [shape = 's32[1]{0}', space=sflag, size = 0x4, scoped, tag = 'scoped memory for forward.7']
  #allocation3 [shape = 'u8[1024]{0}', space=smem, size = 0x400, scoped, tag = 'prefetched SMEM operand 0']
  #allocation4 [shape = 'u8[1024]{0}', space=smem, size = 0x400, scoped, tag = 'prefetched SMEM operand 1']
  #allocation5 [shape = 'u8[512]{0}', space=smem, size = 0x200, scoped, tag = 'prefetched SMEM operand 2']
  %s0 = inlined_call_operand.vmem [shape: s32[2,7], index: 0, kind: input, shape index: {}]
  %s1 = inlined_call_operand.vmem [shape: s32[2,7], index: 1, kind: input, shape index: {}]
  %s2 = inlined_call_operand.vmem [shape: s32[2], index: 2, kind: input, shape index: {}]
  %s3 = inlined_call_operand.vmem [shape: bf16[7,64,128], index: 3, kind: input, shape index: {}]
  %s4 = inlined_call_operand.vmem [shape: bf16[896,128], index: 4, kind: input, shape index: {}]
  %s5 = inlined_call_operand.vmem [shape: f32[3,128], index: 5, kind: input, shape index: {}]
  %s6 = inlined_call_operand.vmem [shape: f32[128,128], index: 6, kind: output, shape index: {}]
  %s7 = sld [smem:[#allocation0]]
  $region57: #{forward.7} parent=0
    _
  %s9 = ssub.s32 1, %s7
  %s10 = scalar_select 0, %s9, %s7
  %s11 = sshll.u32 %s0, 4
  %s12 = int_to_ptr.vmem [resolvable:$true] %s11
  %14 = dma.vmem_to_smem %s12, 32, [#allocation3], [#allocation2]
  %s15 = sshll.u32 %s1, 4
  %s16 = int_to_ptr.vmem [resolvable:$true] %s15
  %18 = dma.vmem_to_smem %s16, 32, [#allocation4], [#allocation2]
  %s19 = sshll.u32 %s2, 4
  %s20 = int_to_ptr.vmem [resolvable:$true] %s19
  %22 = dma.vmem_to_smem %s20, 16, [#allocation5], [#allocation2]
  %23 = dma.done [#allocation2], 80
  %24 = sfence
  loop: start=0, step=1, limit=16
  $region2: #{forward.7} parent=0 // loop_pre_header
    _
  $region3: #{forward.7} parent=0 // loop_header
    %s26 = sphi 0, %s30
    %p27 = scmp.ge.s32.totalorder %s26, 16
    %s33 = sphi 0, %s45
    %s34 = sphi 0, %s41
    %s35 = sphi 0, %s33
    %s36 = sphi 0, %s34
    %s37 = sphi 0, %s35
    %s38 = sphi 0, %s36
    %s64 = sphi 0, %s66
    %s67 = sphi 0, %s64
    %s68 = sphi 0, %s67
    %s84 = sphi 0, %s68
    %s88 = sphi 0, %s88
    %s90 = sphi 0, %s88
    %s91 = sphi 0, %s90
    %s105 = sphi 0, %s91
    %s109 = sphi 0, %s109
    %s111 = sphi 0, %s109
    %s112 = sphi 0, %s111
    %s126 = sphi 0, %s112
    %s132 = sphi 0, %s134
    %s135 = sphi 0, %s132
    %s136 = sphi 0, %s135
    %s152 = sphi 0, %s136
  $region4: #{forward.7} parent=0 // loop_header_branch
    %29 = sbr.rel (%p27) target = $region8
  $region5: #{forward.7} parent=0 // loop_body
    %s31 = ssub.s32 %s26, 1
    %s32 = ssub.s32 %s26, 2
    %s39 = sadd.s32 1, %s34
    %p40 = scmp.ge.s32.totalorder %s39, 7
    %s41 = scalar_select %p40, 0, %s39
    %s42 = sadd.s32 1, %s33
    %s43 = scalar_select %p40, %s42, %s33
    %p44 = scmp.ge.s32.totalorder %s43, 2
    %s45 = scalar_select %p44, 0, %s43
    %s46 = sshra.s32 %s34, 7
    %s47 = sand.u32 %s34, 127
    %s48 = sadd.s32 %s46, %s33
    %s49 = smul.u32 %s48, 128
    %s50 = sshra.s32 %s34, 7
    %s51 = sand.u32 %s34, 127
    %s52 = sadd.s32 %s49, %s51
    %s53 = sld [smem:[#allocation3 + %s52]]
    %s54 = sshra.s32 %s41, 7
    %s55 = sand.u32 %s41, 127
    %s56 = sadd.s32 %s54, %s45
    %s57 = smul.u32 %s56, 128
    %s58 = sshra.s32 %s41, 7
    %s59 = sand.u32 %s41, 127
    %s60 = sadd.s32 %s57, %s59
    %s61 = sld [smem:[#allocation3 + %s60]]
    %s62 = ssub.s32 %s53, %s61
    %p63 = scmp.eq.s32.totalorder %s62, 0
    %s65 = sadd.s32 %s64, 1
    %s66 = scalar_select %p63, %s64, %s65
    %p69 = pneg %p63
    %p70 = scmp.eq.s32.totalorder %s26, 13
    %p71 = por %p69, %p70
    %p72 = scmp.ne.s32.totalorder %s64, %s67
    %p73 = scmp.eq.s32.totalorder %s26, 0
    %p74 = por %p72, %p73
    %p75 = scmp.ne.s32.totalorder %s64, %s67
    %p76 = scmp.eq.s32.totalorder %s31, 13
    %p77 = por %p75, %p76
    %p78 = scmp.ne.s32.totalorder %s67, %s68
    %p79 = scmp.eq.s32.totalorder %s31, 0
    %p80 = por %p78, %p79
    %p81 = scmp.ne.s32.totalorder %s67, %s68
    %p82 = scmp.eq.s32.totalorder %s32, 13
    %p83 = por %p81, %p82
    %p85 = scmp.ne.s32.totalorder %s68, %s84
    %p86 = scmp.eq.s32.totalorder %s32, 0
    %p87 = por %p85, %p86
    %s89 = sadd.s32 %s88, 1
    %p92 = scmp.eq.s32.totalorder %s26, 13
    %p93 = scmp.ne.s32.totalorder %s88, %s90
    %p94 = scmp.eq.s32.totalorder %s26, 0
    %p95 = por %p93, %p94
    %p96 = scmp.ne.s32.totalorder %s88, %s90
    %p97 = scmp.eq.s32.totalorder %s31, 13
    %p98 = por %p96, %p97
    %p99 = scmp.ne.s32.totalorder %s90, %s91
    %p100 = scmp.eq.s32.totalorder %s31, 0
    %p101 = por %p99, %p100
    %p102 = scmp.ne.s32.totalorder %s90, %s91
    %p103 = scmp.eq.s32.totalorder %s32, 13
    %p104 = por %p102, %p103
    %p106 = scmp.ne.s32.totalorder %s91, %s105
    %p107 = scmp.eq.s32.totalorder %s32, 0
    %p108 = por %p106, %p107
    %s110 = sadd.s32 %s109, 1
    %p113 = scmp.eq.s32.totalorder %s26, 13
    %p114 = scmp.ne.s32.totalorder %s109, %s111
    %p115 = scmp.eq.s32.totalorder %s26, 0
    %p116 = por %p114, %p115
    %p117 = scmp.ne.s32.totalorder %s109, %s111
    %p118 = scmp.eq.s32.totalorder %s31, 13
    %p119 = por %p117, %p118
    %p120 = scmp.ne.s32.totalorder %s111, %s112
    %p121 = scmp.eq.s32.totalorder %s31, 0
    %p122 = por %p120, %p121
    %p123 = scmp.ne.s32.totalorder %s111, %s112
    %p124 = scmp.eq.s32.totalorder %s32, 13
    %p125 = por %p123, %p124
    %p127 = scmp.ne.s32.totalorder %s112, %s126
    %p128 = scmp.eq.s32.totalorder %s32, 0
    %p129 = por %p127, %p128
    %s130 = ssub.s32 %s33, %s45
    %p131 = scmp.eq.s32.totalorder %s130, 0
    %s133 = sadd.s32 %s132, 1
    %s134 = scalar_select %p131, %s132, %s133
    %p137 = pneg %p131
    %p138 = scmp.eq.s32.totalorder %s26, 13
    %p139 = por %p137, %p138
    %p140 = scmp.ne.s32.totalorder %s132, %s135
    %p141 = scmp.eq.s32.totalorder %s26, 0
    %p142 = por %p140, %p141
    %p143 = scmp.ne.s32.totalorder %s132, %s135
    %p144 = scmp.eq.s32.totalorder %s31, 13
    %p145 = por %p143, %p144
    %p146 = scmp.ne.s32.totalorder %s135, %s136
    %p147 = scmp.eq.s32.totalorder %s31, 0
    %p148 = por %p146, %p147
    %p149 = scmp.ne.s32.totalorder %s135, %s136
    %p150 = scmp.eq.s32.totalorder %s32, 13
    %p151 = por %p149, %p150
    %p153 = scmp.ne.s32.totalorder %s136, %s152
    %p154 = scmp.eq.s32.totalorder %s32, 0
    %p155 = por %p153, %p154
    %p156 = scmp.le.s32.totalorder 1, %s26
    %p157 = scmp.lt.s32.totalorder %s26, 15
    %p158 = pnand %p156, %p157
    %p159 = pneg %p158
    // Predicated region
    $region9: #{forward.7} parent=5 // pred_check
      _
    $region10: #{forward.7} parent=5 // pred_check_branch
      %161 = sbr.rel (%p158) target = $region12
    $region11: #{forward.7} parent=5 // pred_region
      %s162 = ssub.s32 %s26, 1
      // Predicated region
      $region13: #{forward.7} parent=11 // pred_check
        %p163 = pneg %p101
      $region14: #{forward.7} parent=11 // pred_check_branch
        %165 = sbr.rel (%p163) target = $region16
      $region15: #{forward.7} parent=11 // pred_region
        _
      $region16: #{forward.7} parent=11 // pred_fallthru
        _
      // Predicated region
      $region17: #{forward.7} parent=11 // pred_check
        %p166 = pneg %p122
      $region18: #{forward.7} parent=11 // pred_check_branch
        %168 = sbr.rel (%p166) target = $region20
      $region19: #{forward.7} parent=11 // pred_region
        _
      $region20: #{forward.7} parent=11 // pred_fallthru
        _
    $region12: #{forward.7} parent=5 // pred_fallthru
      _
    %p169 = scmp.lt.s32.totalorder %s26, 14
    // Predicated region
    $region21: #{forward.7} parent=5 // pred_check
      %p170 = pneg %p169
    $region22: #{forward.7} parent=5 // pred_check_branch
      %172 = sbr.rel (%p170) target = $region24
    $region23: #{forward.7} parent=5 // pred_region
      // Predicated region
      $region25: #{forward.7} parent=23 // pred_check
        %p173 = pneg %p74
      $region26: #{forward.7} parent=23 // pred_check_branch
        %175 = sbr.rel (%p173) target = $region28
      $region27: #{forward.7} parent=23 // pred_region
        %s176 = sshra.s32 %s34, 7
        %s177 = sand.u32 %s34, 127
        %s178 = sadd.s32 %s176, %s33
        %s179 = smul.u32 %s178, 128
        %s180 = sshra.s32 %s34, 7
        %s181 = sand.u32 %s34, 127
        %s182 = sadd.s32 %s179, %s181
        %s183 = sld [smem:[#allocation3 + %s182]]
        %p184 = scmp.lt.s32.totalorder %s183, 6
        %s185 = scalar_select %p184, %s183, 6
        %s186 = smul.addr %s185, 8
        %s187 = smul.addr %s186, 4
        %s188 = scalar_lea.vmem %s3, %s187
        %s189 = sshra.s32 %s34, 7
        %s190 = sand.u32 %s34, 127
        %s191 = sadd.s32 %s189, %s33
        %s192 = smul.u32 %s191, 128
        %s193 = sshra.s32 %s34, 7
        %s194 = sand.u32 %s34, 127
        %s195 = sadd.s32 %s192, %s194
        %s196 = sld [smem:[#allocation3 + %s195]]
      $region28: #{forward.7} parent=23 // pred_fallthru
        _
    $region24: #{forward.7} parent=5 // pred_fallthru
      _
    %p197 = scmp.le.s32.totalorder 1, %s26
    %p198 = scmp.lt.s32.totalorder %s26, 15
    %p199 = pnand %p197, %p198
    %p200 = pneg %p199
    // Predicated region
    $region29: #{forward.7} parent=5 // pred_check
      _
    $region30: #{forward.7} parent=5 // pred_check_branch
      %202 = sbr.rel (%p199) target = $region32
    $region31: #{forward.7} parent=5 // pred_region
      %s203 = ssub.s32 %s26, 1
      %s204 = sshra.s32 %s36, 7
      %s205 = sand.u32 %s36, 127
      %s206 = sadd.s32 %s204, %s35
      %s207 = smul.u32 %s206, 128
      %s208 = sshra.s32 %s36, 7
      %s209 = sand.u32 %s36, 127
      %s210 = sadd.s32 %s207, %s209
      %s211 = sld [smem:[#allocation3 + %s210]]
      %p212 = scmp.lt.s32.totalorder %s211, 6
      %s213 = scalar_select %p212, %s211, 6
      %s214 = smul.addr %s213, 8
      %s215 = smul.addr %s214, 4
      %s216 = scalar_lea.vmem %s3, %s215
      %p217 = pneg %p80
      %p218 = pneg %p77
      %p219 = pneg %p101
      %p220 = pneg %p98
      %p221 = pneg %p122
      %p222 = pneg %p119
      %p223 = pneg %p148
      %p224 = pneg %p145
      %s225 = smul.u32 8, %s35
      %p226 = scmp.lt.s32.totalorder %s225, 15
      %s227 = scalar_select %p226, %s225, 15
      %s228 = smul.addr %s227, 8
      %s229 = scalar_lea.vmem %s6, %s228
      %s230 = sshra.s32 %s36, 7
      %s231 = sand.u32 %s36, 127
      %s232 = sadd.s32 %s230, %s35
      %s233 = smul.u32 %s232, 128
      %s234 = sshra.s32 %s36, 7
      %s235 = sand.u32 %s36, 127
      %s236 = sadd.s32 %s233, %s235
      %s237 = sld [smem:[#allocation3 + %s236]]
      %p238 = scmp.lt.s32.totalorder %s237, 6
      %s239 = scalar_select %p238, %s237, 6
      %s240 = smul.addr %s239, 8
      %s241 = smul.addr %s240, 4
      %s242 = scalar_lea.vmem %s3, %s241
      %s243 = sshra.s32 %s36, 7
      %s244 = sand.u32 %s36, 127
      %s245 = sadd.s32 %s243, %s35
      %s246 = smul.u32 %s245, 128
      %s247 = sshra.s32 %s36, 7
      %s248 = sand.u32 %s36, 127
      %s249 = sadd.s32 %s246, %s248
      %s250 = sld [smem:[#allocation3 + %s249]]
      %s251 = smul.u32 8, %s35
      %p252 = scmp.lt.s32.totalorder %s251, 15
      %s253 = scalar_select %p252, %s251, 15
      %s254 = smul.addr %s253, 8
      %s255 = scalar_lea.vmem %s6, %s254
      %s256 = smul.u32 8, %s35
      %p258 = scmp.eq.s32.totalorder %s36, 0
      // Predicated region
      $region33: #{forward.7} parent=31 // pred_check
        %p259 = pneg %p258
      $region34: #{forward.7} parent=31 // pred_check_branch
        %261 = sbr.rel (%p259) target = $region36
      $region35: #{forward.7} parent=31 // pred_region
        %262 = vst [vmem:[%s255] sm:$0xff] 0.0
        %263 = vst [vmem:[%s255 + $0x8] sm:$0xff] 0.0
        %264 = vst [vmem:[%s255 + $0x10] sm:$0xff] 0.0
        %265 = vst [vmem:[%s255 + $0x18] sm:$0xff] 0.0
        %266 = vst [vmem:[%s255 + $0x20] sm:$0xff] 0.0
        %267 = vst [vmem:[%s255 + $0x28] sm:$0xff] 0.0
        %268 = vst [vmem:[%s255 + $0x30] sm:$0xff] 0.0
        %269 = vst [vmem:[%s255 + $0x38] sm:$0xff] 0.0
      $region36: #{forward.7} parent=31 // pred_fallthru
        _
      %s270 = sld [smem:[#allocation5 + %s35]]
      %p271 = scmp.lt.s32.totalorder %s36, %s270
      // Predicated region
      $region37: #{forward.7} parent=31 // pred_check
        %p272 = pneg %p271
      $region38: #{forward.7} parent=31 // pred_check_branch
        %274 = sbr.rel (%p272) target = $region40
      $region39: #{forward.7} parent=31 // pred_region
        %s275 = sshra.s32 %s36, 7
        %s276 = sand.u32 %s36, 127
        %s277 = sadd.s32 %s275, %s35
        %s278 = smul.u32 %s277, 128
        %s279 = sshra.s32 %s36, 7
        %s280 = sand.u32 %s36, 127
        %s281 = sadd.s32 %s278, %s280
        %s282 = sld [smem:[#allocation4 + %s281]]
        %s283 = smul.u32 %s282, 128
        %s284 = sshra.s32 %s283, 3
        %s285 = sand.u32 %s283, 7
        %s286 = smul.addr %s284, 4
        %s287 = scalar_lea.vmem %s4, %s286
        %v288 = vld [vmem:[%s287] sm:$0xf]
        %v289 = vld [vmem:[%s287 + $0x4] sm:$0xf]
        %v290 = vld [vmem:[%s287 + $0x8] sm:$0xf]
        %v291 = vld [vmem:[%s287 + $0xc] sm:$0xf]
        %v292 = vld [vmem:[%s287 + $0x10] sm:$0xf]
        %v293 = vld [vmem:[%s287 + $0x14] sm:$0xf]
        %v294 = vld [vmem:[%s287 + $0x18] sm:$0xf]
        %v295 = vld [vmem:[%s287 + $0x1c] sm:$0xf]
        %v296 = vld [vmem:[%s287 + $0x20] sm:$0xf]
        %v297 = vld [vmem:[%s287 + $0x24] sm:$0xf]
        %v298 = vld [vmem:[%s287 + $0x28] sm:$0xf]
        %v299 = vld [vmem:[%s287 + $0x2c] sm:$0xf]
        %v300 = vld [vmem:[%s287 + $0x30] sm:$0xf]
        %v301 = vld [vmem:[%s287 + $0x34] sm:$0xf]
        %v302 = vld [vmem:[%s287 + $0x38] sm:$0xf]
        %v303 = vld [vmem:[%s287 + $0x3c] sm:$0xf]
        %v304 = vld [vmem:[%s255] sm:$0xff]
        %v305 = vld [vmem:[%s255 + $0x8] sm:$0xff]
        %v306 = vld [vmem:[%s255 + $0x10] sm:$0xff]
        %v307 = vld [vmem:[%s255 + $0x18] sm:$0xff]
        %v308 = vld [vmem:[%s255 + $0x20] sm:$0xff]
        %v309 = vld [vmem:[%s255 + $0x28] sm:$0xff]
        %v310 = vld [vmem:[%s255 + $0x30] sm:$0xff]
        %v311 = vld [vmem:[%s255 + $0x38] sm:$0xff]
        %v312 = vld [vmem:[%s242] sm:$0xf]
        %v313 = vld [vmem:[%s242 + $0x4] sm:$0xf]
        %v314 = vld [vmem:[%s242 + $0x8] sm:$0xf]
        %v315 = vld [vmem:[%s242 + $0xc] sm:$0xf]
        %v316 = vld [vmem:[%s242 + $0x10] sm:$0xf]
        %v317 = vld [vmem:[%s242 + $0x14] sm:$0xf]
        %v318 = vld [vmem:[%s242 + $0x18] sm:$0xf]
        %v319 = vld [vmem:[%s242 + $0x1c] sm:$0xf]
        %v328 = vunpack.c.l.b16 %v312
        %v329 = vunpack.c.l.b16 %v313
        %v330 = vunpack.c.l.b16 %v314
        %v331 = vunpack.c.l.b16 %v315
        %v332 = vunpack.c.l.b16 %v316
        %v333 = vunpack.c.l.b16 %v317
        %v334 = vunpack.c.l.b16 %v318
        %v335 = vunpack.c.l.b16 %v319
        %v336 = vpack.c.b16 %v329, %v328
        %v337 = vpack.c.b16 %v331, %v330
        %v338 = vpack.c.b16 %v333, %v332
        %v339 = vpack.c.b16 %v335, %v334
        %v360 = vunpack.c.l.b16 %v288
        %v361 = vunpack.c.l.b16 %v289
        %v362 = vunpack.c.l.b16 %v290
        %v363 = vunpack.c.l.b16 %v291
        %v364 = vunpack.c.l.b16 %v292
        %v365 = vunpack.c.l.b16 %v293
        %v366 = vunpack.c.l.b16 %v294
        %v367 = vunpack.c.l.b16 %v295
        %v368 = vunpack.c.l.b16 %v296
        %v369 = vunpack.c.l.b16 %v297
        %v370 = vunpack.c.l.b16 %v298
        %v371 = vunpack.c.l.b16 %v299
        %v372 = vunpack.c.l.b16 %v300
        %v373 = vunpack.c.l.b16 %v301
        %v374 = vunpack.c.l.b16 %v302
        %v375 = vunpack.c.l.b16 %v303
        %v376 = vpack.c.b16 %v361, %v360
        %v377 = vpack.c.b16 %v363, %v362
        %v378 = vpack.c.b16 %v365, %v364
        %v379 = vpack.c.b16 %v367, %v366
        %v380 = vpack.c.b16 %v369, %v368
        %v381 = vpack.c.b16 %v371, %v370
        %v382 = vpack.c.b16 %v373, %v372
        %v383 = vpack.c.b16 %v375, %v374
        %392 = vmatprep.subr.bf16.mxu0 0
        %393 = vmatpush1.bf16.msra.mxu0 %v376
        %394 = vmatprep.subr.bf16.mxu0 0
        %395 = vmatpush1.bf16.msra.mxu0 %v377
        %396 = vmatprep.subr.bf16.mxu0 0
        %397 = vmatpush1.bf16.msra.mxu0 %v378
        %398 = vmatprep.subr.bf16.mxu0 0
        %399 = vmatpush1.bf16.msra.mxu0 %v379
        %400 = vmatprep.subr.bf16.mxu0 0
        %401 = vmatpush1.bf16.msra.mxu0 %v380
        %402 = vmatprep.subr.bf16.mxu0 0
        %403 = vmatpush1.bf16.msra.mxu0 %v381
        %404 = vmatprep.subr.bf16.mxu0 0
        %405 = vmatpush1.bf16.msra.mxu0 %v382
        %406 = vmatprep.subr.bf16.mxu0 0
        %407 = vmatpush1.bf16.msra.mxu0 %v383
        %408 = vmatprep.subr.bf16.mxu0 0
        %409 = vmatpush1.bf16.msra.mxu0 0
        %410 = vmatprep.subr.bf16.mxu0 0
        %411 = vmatpush1.bf16.msra.mxu0 0
        %412 = vmatprep.subr.bf16.mxu0 0
        %413 = vmatpush1.bf16.msra.mxu0 0
        %414 = vmatprep.subr.bf16.mxu0 0
        %415 = vmatpush1.bf16.msra.mxu0 0
        %416 = vmatprep.subr.bf16.mxu0 0
        %417 = vmatpush1.bf16.msra.mxu0 0
        %418 = vmatprep.subr.bf16.mxu0 0
        %419 = vmatpush1.bf16.msra.mxu0 0
        %420 = vmatprep.subr.bf16.mxu0 0
        %421 = vmatpush1.bf16.msra.mxu0 0
        %422 = vmatprep.subr.bf16.mxu0 0
        %423 = vmatpush1.bf16.msra.mxu0 0
        %424 = vmatprep.mubr.bf16.mxu0 0
        %425 = vmatmul.mubr.bf16.gmra.mrb[0].mxu0 %v336
        %v426 = vpop.f32.mrb[0].mxu0
        %v427 = vadd.f32 0.0, %v426
        %v428 = vpop.f32.mrb[0].mxu0
        %v429 = vpop.f32.mrb[0].mxu0
        %v430 = vadd.f32 0.0, %v429
        %v431 = vpop.f32.mrb[0].mxu0
        %432 = vmatprep.mubr.bf16.mxu0 0
        %433 = vmatmul.mubr.bf16.gmra.mrb[0].mxu0 %v337
        %v434 = vpop.f32.mrb[0].mxu0
        %v435 = vadd.f32 0.0, %v434
        %v436 = vpop.f32.mrb[0].mxu0
        %v437 = vpop.f32.mrb[0].mxu0
        %v438 = vadd.f32 0.0, %v437
        %v439 = vpop.f32.mrb[0].mxu0
        %440 = vmatprep.mubr.bf16.mxu0 0
        %441 = vmatmul.mubr.bf16.gmra.mrb[0].mxu0 %v338
        %v442 = vpop.f32.mrb[0].mxu0
        %v443 = vadd.f32 0.0, %v442
        %v444 = vpop.f32.mrb[0].mxu0
        %v445 = vpop.f32.mrb[0].mxu0
        %v446 = vadd.f32 0.0, %v445
        %v447 = vpop.f32.mrb[0].mxu0
        %448 = vmatprep.mubr.bf16.mxu0 0
        %449 = vmatmul.mubr.bf16.gmra.mrb[0].mxu0 %v339
        %v450 = vpop.f32.mrb[0].mxu0
        %v451 = vadd.f32 0.0, %v450
        %v452 = vpop.f32.mrb[0].mxu0
        %v453 = vpop.f32.mrb[0].mxu0
        %v454 = vadd.f32 0.0, %v453
        %v455 = vpop.f32.mrb[0].mxu0
        %456 = vdwg.mxu0
        %v457 = vadd.f32 %v304, %v427
        %v458 = vadd.f32 %v305, %v430
        %v459 = vadd.f32 %v306, %v435
        %v460 = vadd.f32 %v307, %v438
        %v461 = vadd.f32 %v308, %v443
        %v462 = vadd.f32 %v309, %v446
        %v463 = vadd.f32 %v310, %v451
        %v464 = vadd.f32 %v311, %v454
        %465 = vst [vmem:[%s255] sm:$0xff] %v457
        %466 = vst [vmem:[%s255 + $0x8] sm:$0xff] %v458
        %467 = vst [vmem:[%s255 + $0x10] sm:$0xff] %v459
        %468 = vst [vmem:[%s255 + $0x18] sm:$0xff] %v460
        %469 = vst [vmem:[%s255 + $0x20] sm:$0xff] %v461
        %470 = vst [vmem:[%s255 + $0x28] sm:$0xff] %v462
        %471 = vst [vmem:[%s255 + $0x30] sm:$0xff] %v463
        %472 = vst [vmem:[%s255 + $0x38] sm:$0xff] %v464
      $region40: #{forward.7} parent=31 // pred_fallthru
        _
      %p473 = scmp.eq.s32.totalorder %s36, 6
      // Predicated region
      $region41: #{forward.7} parent=31 // pred_check
        %p474 = pneg %p473
      $region42: #{forward.7} parent=31 // pred_check_branch
        %476 = sbr.rel (%p474) target = $region44
      $region43: #{forward.7} parent=31 // pred_region
        %v477 = vld [vmem:[%s255] sm:$0xff]
        %v478 = vld [vmem:[%s255 + $0x8] sm:$0xff]
        %v479 = vld [vmem:[%s255 + $0x10] sm:$0xff]
        %v480 = vld [vmem:[%s255 + $0x18] sm:$0xff]
        %v481 = vld [vmem:[%s255 + $0x20] sm:$0xff]
        %v482 = vld [vmem:[%s255 + $0x28] sm:$0xff]
        %v483 = vld [vmem:[%s255 + $0x30] sm:$0xff]
        %v484 = vld [vmem:[%s255 + $0x38] sm:$0xff]
        %v485 = vld [vmem:[%s5] sm:$0x1]
        %v486 = vlaneseq
        %v487 = vshrl.u32 %v486, 7
        %v488 = vsub.s32 0, %v487
        %v489 = vrot.slane %v485, %v488
        %v490 = vadd.f32 %v477, %v489
        %v491 = vadd.f32 %v478, %v489
        %v492 = vadd.f32 %v479, %v489
        %v493 = vadd.f32 %v480, %v489
        %v494 = vadd.f32 %v481, %v489
        %v495 = vadd.f32 %v482, %v489
        %v496 = vadd.f32 %v483, %v489
        %v497 = vadd.f32 %v484, %v489
        %v498 = vlaneseq
        %v499 = vand.u32 %v498, 127
        %vm500 = vcmp.lt.s32.totalorder %v499, 8
        %v501 = vsel %vm500, %v490, 0.0
        %v502 = vsel %vm500, %v491, 0.0
        %v503 = vsel %vm500, %v492, 0.0
        %v504 = vsel %vm500, %v493, 0.0
        %v505 = vsel %vm500, %v494, 0.0
        %v506 = vsel %vm500, %v495, 0.0
        %v507 = vsel %vm500, %v496, 0.0
        %v508 = vsel %vm500, %v497, 0.0
        %509 = vadd.xlane.f32.xlu0 %v501
        %v510 = vpop.xlane.xlu0 %509
        %511 = vadd.xlane.f32.xlu0 %v502
        %v512 = vpop.xlane.xlu0 %511
        %513 = vadd.xlane.f32.xlu0 %v503
        %v514 = vpop.xlane.xlu0 %513
        %515 = vadd.xlane.f32.xlu0 %v504
        %v516 = vpop.xlane.xlu0 %515
        %517 = vadd.xlane.f32.xlu0 %v505
        %v518 = vpop.xlane.xlu0 %517
        %519 = vadd.xlane.f32.xlu0 %v506
        %v520 = vpop.xlane.xlu0 %519
        %521 = vadd.xlane.f32.xlu0 %v507
        %v522 = vpop.xlane.xlu0 %521
        %523 = vadd.xlane.f32.xlu0 %v508
        %v524 = vpop.xlane.xlu0 %523
        %v525 = vmul.f32 %v510, 0.125
        %v526 = vmul.f32 %v512, 0.125
        %v527 = vmul.f32 %v514, 0.125
        %v528 = vmul.f32 %v516, 0.125
        %v529 = vmul.f32 %v518, 0.125
        %v530 = vmul.f32 %v520, 0.125
        %v531 = vmul.f32 %v522, 0.125
        %v532 = vmul.f32 %v524, 0.125
        %v533 = vsub.f32 %v490, %v525
        %v534 = vsub.f32 %v491, %v526
        %v535 = vsub.f32 %v492, %v527
        %v536 = vsub.f32 %v493, %v528
        %v537 = vsub.f32 %v494, %v529
        %v538 = vsub.f32 %v495, %v530
        %v539 = vsub.f32 %v496, %v531
        %v540 = vsub.f32 %v497, %v532
        %v541 = vsel %vm500, %v533, 0.0
        %v542 = vsel %vm500, %v534, 0.0
        %v543 = vsel %vm500, %v535, 0.0
        %v544 = vsel %vm500, %v536, 0.0
        %v545 = vsel %vm500, %v537, 0.0
        %v546 = vsel %vm500, %v538, 0.0
        %v547 = vsel %vm500, %v539, 0.0
        %v548 = vsel %vm500, %v540, 0.0
        %v549 = vmul.f32 %v541, %v541
        %v550 = vmul.f32 %v542, %v542
        %v551 = vmul.f32 %v543, %v543
        %v552 = vmul.f32 %v544, %v544
        %v553 = vmul.f32 %v545, %v545
        %v554 = vmul.f32 %v546, %v546
        %v555 = vmul.f32 %v547, %v547
        %v556 = vmul.f32 %v548, %v548
        %557 = vadd.xlane.f32.xlu0 %v549
        %v558 = vpop.xlane.xlu0 %557
        %559 = vadd.xlane.f32.xlu0 %v550
        %v560 = vpop.xlane.xlu0 %559
        %561 = vadd.xlane.f32.xlu0 %v551
        %v562 = vpop.xlane.xlu0 %561
        %563 = vadd.xlane.f32.xlu0 %v552
        %v564 = vpop.xlane.xlu0 %563
        %565 = vadd.xlane.f32.xlu0 %v553
        %v566 = vpop.xlane.xlu0 %565
        %567 = vadd.xlane.f32.xlu0 %v554
        %v568 = vpop.xlane.xlu0 %567
        %569 = vadd.xlane.f32.xlu0 %v555
        %v570 = vpop.xlane.xlu0 %569
        %571 = vadd.xlane.f32.xlu0 %v556
        %v572 = vpop.xlane.xlu0 %571
        %v573 = vmul.f32 %v558, 0.125
        %v574 = vmul.f32 %v560, 0.125
        %v575 = vmul.f32 %v562, 0.125
        %v576 = vmul.f32 %v564, 0.125
        %v577 = vmul.f32 %v566, 0.125
        %v578 = vmul.f32 %v568, 0.125
        %v579 = vmul.f32 %v570, 0.125
        %v580 = vmul.f32 %v572, 0.125
        %v581 = vadd.f32 %v573, 1e-05
        %v582 = vadd.f32 %v574, 1e-05
        %v583 = vadd.f32 %v575, 1e-05
        %v584 = vadd.f32 %v576, 1e-05
        %v585 = vadd.f32 %v577, 1e-05
        %v586 = vadd.f32 %v578, 1e-05
        %v587 = vadd.f32 %v579, 1e-05
        %v588 = vadd.f32 %v580, 1e-05
        %v589 = vrsqrt.pop %v581
        %v590 = vrsqrt.pop %v582
        %v591 = vrsqrt.pop %v583
        %v592 = vrsqrt.pop %v584
        %v593 = vrsqrt.pop %v585
        %v594 = vrsqrt.pop %v586
        %v595 = vrsqrt.pop %v587
        %v596 = vrsqrt.pop %v588
        %v597 = vmul.f32 %v541, %v589
        %v598 = vmul.f32 %v542, %v590
        %v599 = vmul.f32 %v543, %v591
        %v600 = vmul.f32 %v544, %v592
        %v601 = vmul.f32 %v545, %v593
        %v602 = vmul.f32 %v546, %v594
        %v603 = vmul.f32 %v547, %v595
        %v604 = vmul.f32 %v548, %v596
        %v605 = vld [vmem:[%s5 + $0x1] sm:$0x1]
        %v606 = vlaneseq
        %v607 = vshrl.u32 %v606, 7
        %v608 = vsub.s32 0, %v607
        %v609 = vrot.slane %v605, %v608
        %v610 = vmul.f32 %v597, %v609
        %v611 = vmul.f32 %v598, %v609
        %v612 = vmul.f32 %v599, %v609
        %v613 = vmul.f32 %v600, %v609
        %v614 = vmul.f32 %v601, %v609
        %v615 = vmul.f32 %v602, %v609
        %v616 = vmul.f32 %v603, %v609
        %v617 = vmul.f32 %v604, %v609
        %v618 = vld [vmem:[%s5 + $0x2] sm:$0x1]
        %v619 = vlaneseq
        %v620 = vshrl.u32 %v619, 7
        %v621 = vsub.s32 0, %v620
        %v622 = vrot.slane %v618, %v621
        %v623 = vadd.f32 %v610, %v622
        %v624 = vadd.f32 %v611, %v622
        %v625 = vadd.f32 %v612, %v622
        %v626 = vadd.f32 %v613, %v622
        %v627 = vadd.f32 %v614, %v622
        %v628 = vadd.f32 %v615, %v622
        %v629 = vadd.f32 %v616, %v622
        %v630 = vadd.f32 %v617, %v622
        %v631 = vsel %vm500, %v623, 0.0
        %v632 = vsel %vm500, %v624, 0.0
        %v633 = vsel %vm500, %v625, 0.0
        %v634 = vsel %vm500, %v626, 0.0
        %v635 = vsel %vm500, %v627, 0.0
        %v636 = vsel %vm500, %v628, 0.0
        %v637 = vsel %vm500, %v629, 0.0
        %v638 = vsel %vm500, %v630, 0.0
        %639 = vst [vmem:[%s255] sm:$0xff] %v631
        %640 = vst [vmem:[%s255 + $0x8] sm:$0xff] %v632
        %641 = vst [vmem:[%s255 + $0x10] sm:$0xff] %v633
        %642 = vst [vmem:[%s255 + $0x18] sm:$0xff] %v634
        %643 = vst [vmem:[%s255 + $0x20] sm:$0xff] %v635
        %644 = vst [vmem:[%s255 + $0x28] sm:$0xff] %v636
        %645 = vst [vmem:[%s255 + $0x30] sm:$0xff] %v637
        %646 = vst [vmem:[%s255 + $0x38] sm:$0xff] %v638
      $region44: #{forward.7} parent=31 // pred_fallthru
        _
      %s647 = smul.u32 8, %s35
      %p648 = scmp.lt.s32.totalorder %s647, 15
      %s649 = scalar_select %p648, %s647, 15
      %s650 = smul.addr %s649, 8
      %s651 = scalar_lea.vmem %s6, %s650
      // Predicated region
      $region45: #{forward.7} parent=31 // pred_check
        %p652 = pneg %p145
      $region46: #{forward.7} parent=31 // pred_check_branch
        %654 = sbr.rel (%p652) target = $region48
      $region47: #{forward.7} parent=31 // pred_region
        %s655 = smul.u32 8, %s35
      $region48: #{forward.7} parent=31 // pred_fallthru
        _
    $region32: #{forward.7} parent=5 // pred_fallthru
      _
    %p656 = scmp.le.s32.totalorder 2, %s26
    // Predicated region
    $region49: #{forward.7} parent=5 // pred_check
      %p657 = pneg %p656
    $region50: #{forward.7} parent=5 // pred_check_branch
      %659 = sbr.rel (%p657) target = $region52
    $region51: #{forward.7} parent=5 // pred_region
      %s660 = ssub.s32 %s26, 2
      // Predicated region
      $region53: #{forward.7} parent=51 // pred_check
        %p661 = pneg %p151
      $region54: #{forward.7} parent=51 // pred_check_branch
        %663 = sbr.rel (%p661) target = $region56
      $region55: #{forward.7} parent=51 // pred_region
        %s664 = smul.u32 8, %s37
        %p665 = scmp.lt.s32.totalorder %s664, 15
        %s666 = scalar_select %p665, %s664, 15
        %s667 = smul.addr %s666, 8
        %s668 = scalar_lea.vmem %s6, %s667
      $region56: #{forward.7} parent=51 // pred_fallthru
        _
    $region52: #{forward.7} parent=5 // pred_fallthru
      _
  $region6: #{forward.7} parent=0 // loop_footer
    %s30 = sadd.s32 1, %s26
  $region7: #{forward.7} parent=0 // loop_footer_branch
    %25 = sbr.rel target = $region3
  $region8: #{forward.7} parent=0 // loop_exit
    _

</llo_original>
